<compile_context>
chip_gen: v5e
topology: v5e:2x2
jax: 0.10.0
libtpu: 0.0.40
codegen_flags: <defaults>
</compile_context>

<pallas_src>
import jax
import jax.numpy as jnp
import numpy as np
from jax.experimental import pallas as pl
from jax.experimental.pallas import tpu as pltpu

LN_EPS = 1e-5
BN_EPS = 1e-5
LANE = 128
SUBLANE = 8


def _round_up(x, m):
    return (x + m - 1) // m * m


# --------------------------------------------------------------------------
# Kernel
# --------------------------------------------------------------------------
def _make_mlp_kernel(h1_true, h2_true):
    """Builds the fused kernel with the TRUE hidden widths baked in for LN."""
    inv_h1 = 1.0 / float(h1_true)
    inv_h2 = 1.0 / float(h2_true)

    def _ln_relu(h, gamma, beta, inv_n):
        # One-pass variance: the two cross-lane reductions are independent, so
        # they can issue back-to-back on the XLU between the matmuls.
        # Padded lanes of h are exactly zero (zero-padded weights/bias), so
        # dividing the raw sums by the true feature count is exact.
        mu = jnp.sum(h, axis=-1, keepdims=True) * inv_n
        m2 = jnp.sum(h * h, axis=-1, keepdims=True) * inv_n
        var = jnp.maximum(m2 - mu * mu, 0.0)      # guard fp32 cancellation
        h = (h - mu) * jax.lax.rsqrt(var + LN_EPS) * gamma + beta
        return jnp.maximum(h, 0.0)                # ReLU (padded lanes stay 0)

    def kernel(x_ref, w1_ref, b1_ref, g1_ref, be1_ref,
               w2_ref, b2_ref, g2_ref, be2_ref,
               w3_ref, b3_ref, out_ref):
        # Hidden layer 1 (eval-mode input BatchNorm already folded into w1/b1).
        # x arrives fp32 & lane-unpadded; cast to bf16 here (K is tiny).
        h = jnp.dot(x_ref[...].astype(jnp.bfloat16), w1_ref[...],
                    preferred_element_type=jnp.float32) + b1_ref[...]
        h = _ln_relu(h, g1_ref[...], be1_ref[...], inv_h1)

        # Hidden layer 2: Linear -> LayerNorm -> ReLU (dropout = identity, eval).
        h = jnp.dot(h.astype(jnp.bfloat16), w2_ref[...],
                    preferred_element_type=jnp.float32) + b2_ref[...]
        h = _ln_relu(h, g2_ref[...], be2_ref[...], inv_h2)

        # Output layer: Linear only (logits), fp32 out.  Only the true class
        # columns are stored (out_ref lane dim == C, not Cp).
        out = jnp.dot(h.astype(jnp.bfloat16), w3_ref[...],
                      preferred_element_type=jnp.float32) + b3_ref[...]
        out_ref[...] = out[:, :out_ref.shape[1]]

    return kernel


# --------------------------------------------------------------------------
# Parameter preparation (fold BN, pad hidden dims to lane multiples, bf16)
# --------------------------------------------------------------------------
def prepare_kernel_params(p, in_feats, hiddens, n_classes):
    h1, h2 = hiddens
    h1p = _round_up(h1, LANE)
    h2p = _round_up(h2, LANE)
    cp = _round_up(n_classes, LANE)

    # Fold the eval-mode BatchNorm1d (pure per-feature affine) into W1/b1:
    #   (x*s + t) @ W1 + b1 == x @ (diag(s) @ W1) + (t @ W1 + b1)
    w1f = p["w1"] * p["bn_scale"].T          # [F, H1]
    b1f = p["bn_shift"] @ p["w1"] + p["b1"]  # [1, H1]

    def pad2(a, rows, cols):
        return jnp.pad(a, ((0, rows - a.shape[0]), (0, cols - a.shape[1])))

    kp = {
        # NOTE: w1's K dim stays at the TRUE feature count F -> x is streamed
        # unpadded (no 4x lane inflation on the dominant HBM read).
        "w1": pad2(w1f, in_feats, h1p).astype(jnp.bfloat16),
        "b1": pad2(b1f, 1, h1p),
        "ln1_g": pad2(p["ln1_g"], 1, h1p),   # padded gamma/beta = 0 -> padded lanes stay 0
        "ln1_b": pad2(p["ln1_b"], 1, h1p),
        "w2": pad2(p["w2"], h1p, h2p).astype(jnp.bfloat16),
        "b2": pad2(p["b2"], 1, h2p),
        "ln2_g": pad2(p["ln2_g"], 1, h2p),
        "ln2_b": pad2(p["ln2_b"], 1, h2p),
        "w3": pad2(p["w3"], h2p, cp).astype(jnp.bfloat16),
        "b3": pad2(p["b3"], 1, cp),
    }
    dims = dict(F=in_feats, H1=h1, H2=h2, C=n_classes,
                H1p=h1p, H2p=h2p, Cp=cp)
    return kp, dims


# --------------------------------------------------------------------------
# Generation-aware VMEM sizing + tile selection
# --------------------------------------------------------------------------
def _vmem_budget_and_limit():
    """~5/8 of per-core VMEM as the tile-sizing budget, ~3/4 as the Mosaic
    scoped limit.  v5e/v6e (128 MiB): 80 / 96 MiB;  v7x (64 MiB): 40 / 48 MiB."""
    cap = 0
    try:
        cap = int(pltpu.get_tpu_info().vmem_capacity_bytes)
    except Exception:
        cap = 0
    if cap <= 0:
        cap = 64 * 1024 * 1024   # conservative fallback: v7x per-TensorCore VMEM
    return (cap * 5) // 8, (cap * 3) // 4


def _choose_tile_m(tile_m, n_rows, dims, vmem_budget):
    """Largest 16-aligned tile_m <= requested that fits the per-step VMEM budget."""
    tile_m = max(16, _round_up(min(tile_m, max(n_rows, 1)), 16))

    # bf16 weights + fp32 bias/LN vectors, double-buffered (default pipelining).
    w_bytes = 2 * 2 * (dims["F"] * dims["H1p"] + dims["H1p"] * dims["H2p"]
                       + dims["H2p"] * dims["Cp"])
    vec_bytes = 2 * 4 * SUBLANE * 3 * max(dims["H1p"], dims["H2p"], dims["Cp"])

    def step_bytes(tm):
        stream = (2 * tm * dims["F"] * 4                   # x blocks (fp32, 2 buffers)
                  + 2 * tm * max(dims["C"], LANE) * 4)     # out blocks (lane-padded in VMEM)
        live = tm * (dims["H1p"] + dims["H2p"]) * 6 + tm * dims["Cp"] * 4
        return w_bytes + vec_bytes + stream + live

    while tile_m > 16 and step_bytes(tile_m) > vmem_budget:
        tile_m = max(16, _round_up(tile_m // 2, 16))

    # Keep the grid length >= 2 whenever there are enough rows so both v7x
    # TensorCores get work under dimension_semantics=("parallel",).  Costs at
    # most one extra ~0.35us grid step on single-TC chips (negligible).
    if n_rows > 2 * 16 and tile_m >= n_rows:
        tile_m = max(16, _round_up(pl.cdiv(n_rows, 2), 16))
    return tile_m


# --------------------------------------------------------------------------
# Wrapper
# --------------------------------------------------------------------------
def mlp_norm_forward(x, kparams, dims, *, tile_m=2048):
    """x: [N, in_feats] float32.  kparams/dims from prepare_kernel_params.
    Intended to be called under jax.jit so the (rare) row-pad / final slice
    fuse with surrounding ops."""
    n, f = x.shape
    assert f == dims["F"]
    vmem_budget, vmem_limit = _vmem_budget_and_limit()
    tile_m = _choose_tile_m(tile_m, n, dims, vmem_budget)
    n_pad = _round_up(max(n, tile_m), tile_m)

    # Rows padded to a tile multiple only when needed (fp32, no cast, no lane
    # padding); the extra zero rows are sliced off after the call.
    xp = x if n_pad == n else jnp.pad(x, ((0, n_pad - n), (0, 0)))
    grid = (n_pad // tile_m,)

    def row_spec(cols):
        return pl.BlockSpec((tile_m, cols), lambda i: (i, 0))

    def full_spec(shape):
        # Grid-invariant parameter block (weights / biases / LN affine).
        return pl.BlockSpec(shape, lambda i: (0, 0))

    in_specs = [
        row_spec(f),                                                        # x (unpadded F)
        full_spec((f, dims["H1p"])), full_spec((1, dims["H1p"])),           # w1, b1
        full_spec((1, dims["H1p"])), full_spec((1, dims["H1p"])),           # ln1 g/b
        full_spec((dims["H1p"], dims["H2p"])), full_spec((1, dims["H2p"])), # w2, b2
        full_spec((1, dims["H2p"])), full_spec((1, dims["H2p"])),           # ln2 g/b
        full_spec((dims["H2p"], dims["Cp"])), full_spec((1, dims["Cp"])),   # w3, b3
    ]

    mm_elems = (f * dims["H1p"] + dims["H1p"] * dims["H2p"]
                + dims["H2p"] * dims["Cp"])
    cost = pl.CostEstimate(
        flops=2 * n_pad * mm_elems,
        transcendentals=2 * n_pad,                      # rsqrt per row per LN
        bytes_accessed=n_pad * f * 4                    # x stream (fp32, unpadded)
                       + n_pad * dims["C"] * 4          # logits writeback (true C)
                       + 2 * mm_elems)                  # bf16 weights

    out = pl.pallas_call(
        _make_mlp_kernel(dims["H1"], dims["H2"]),
        out_shape=jax.ShapeDtypeStruct((n_pad, dims["C"]), jnp.float32),
        grid_spec=pltpu.PrefetchScalarGridSpec(
            num_scalar_prefetch=0,
            grid=grid,
            in_specs=in_specs,
            out_specs=row_spec(dims["C"]),              # full-extent true-C block
        ),
        compiler_params=pltpu.CompilerParams(
            dimension_semantics=("parallel",),          # megacore-shard the row axis
            vmem_limit_bytes=int(vmem_limit),
        ),
        cost_estimate=cost,
    )(xp,
      kparams["w1"], kparams["b1"], kparams["ln1_g"], kparams["ln1_b"],
      kparams["w2"], kparams["b2"], kparams["ln2_g"], kparams["ln2_b"],
      kparams["w3"], kparams["b3"])

    return out[:n]


# --------------------------------------------------------------------------
# Parameter construction + references
# --------------------------------------------------------------------------
def make_params(key, in_feats, hiddens, n_classes):
    """Deterministic synthetic init of all MLP_NORM parameters (logical layout)."""
    dims = [in_feats] + hiddens + [n_classes]
    keys = jax.random.split(key, 2 * (len(dims) - 1))
    params = {}
    # Linear layers: PyTorch stores W as [out, in]; we pre-transpose to [in, out].
    for i in range(len(dims) - 1):
        fan_in = dims[i]
        bound = 1.0 / np.sqrt(fan_in)
        w = jax.random.uniform(keys[2 * i], (dims[i + 1], dims[i]),
                               minval=-bound, maxval=bound, dtype=jnp.float32)
        b = jax.random.uniform(keys[2 * i + 1], (dims[i + 1],),
                               minval=-bound, maxval=bound, dtype=jnp.float32)
        params[f"w{i + 1}"] = jnp.asarray(w.T)              # [in, out]
        params[f"b{i + 1}"] = b.reshape(1, -1)              # [1, out]
    # Input BatchNorm1d (eval): running_mean=0, running_var=1, gamma=1, beta=0
    # folded into per-feature scale/shift.
    rm = jnp.zeros((in_feats,), jnp.float32)
    rv = jnp.ones((in_feats,), jnp.float32)
    gamma0 = jnp.ones((in_feats,), jnp.float32)
    beta0 = jnp.zeros((in_feats,), jnp.float32)
    scale = gamma0 / jnp.sqrt(rv + BN_EPS)
    shift = beta0 - rm * scale
    params["bn_scale"] = scale.reshape(1, -1)
    params["bn_shift"] = shift.reshape(1, -1)
    # LayerNorms after each hidden layer: gamma=1, beta=0 at init.
    for i, h in enumerate(hiddens):
        params[f"ln{i + 1}_g"] = jnp.ones((1, h), jnp.float32)
        params[f"ln{i + 1}_b"] = jnp.zeros((1, h), jnp.float32)
    return params


def reference_forward(x, p):
    """Pure-fp32 JAX reference matching the PyTorch forward (eval mode)."""
    h = x * p["bn_scale"] + p["bn_shift"]
    for i in (1, 2):
        h = h @ p[f"w{i}"] + p[f"b{i}"]
        mu = jnp.mean(h, axis=-1, keepdims=True)
        var = jnp.mean((h - mu) ** 2, axis=-1, keepdims=True)
        h = (h - mu) * jax.lax.rsqrt(var + LN_EPS) * p[f"ln{i}_g"] + p[f"ln{i}_b"]
        h = jnp.maximum(h, 0.0)
        # dropout: identity (eval mode)
    return h @ p["w3"] + p["b3"]


def reference_forward_bf16(x, p):
    """Pure-JAX emulation of the kernel's exact math (bf16 matmuls, fp32 acc)."""
    w1f = p["w1"] * p["bn_scale"].T
    b1f = p["bn_shift"] @ p["w1"] + p["b1"]

    def mm(a, w):
        return jnp.dot(a.astype(jnp.bfloat16), w.astype(jnp.bfloat16),
                       preferred_element_type=jnp.float32)

    def ln_relu(h, g, b):
        mu = jnp.mean(h, axis=-1, keepdims=True)
        m2 = jnp.mean(h * h, axis=-1, keepdims=True)
        var = jnp.maximum(m2 - mu * mu, 0.0)
        h = (h - mu) * jax.lax.rsqrt(var + LN_EPS) * g + b
        return jnp.maximum(h, 0.0)

    h = mm(x, w1f) + b1f
    h = ln_relu(h, p["ln1_g"], p["ln1_b"])
    h = mm(h, p["w2"]) + p["b2"]
    h = ln_relu(h, p["ln2_g"], p["ln2_b"])
    return mm(h, p["w3"]) + p["b3"]


if __name__ == "__main__":
    in_feats, hiddens, n_classes = 32, [64, 32], 8
    N = 300  # deliberately NOT a multiple of the tile -> exercises ragged handling

    key = jax.random.PRNGKey(0)
    k_x, k_p = jax.random.split(key)
    x = jax.random.normal(k_x, (N, in_feats), dtype=jnp.float32)

    params = make_params(k_p, in_feats, hiddens, n_classes)
    kparams, kdims = prepare_kernel_params(params, in_feats, hiddens, n_classes)

    # jit the wrapper so the (row-only) pad and trailing slice fuse with the
    # kernel's input/output DMAs instead of materializing extra HBM copies.
    fwd = jax.jit(lambda xx, kp: mlp_norm_forward(xx, kp, kdims))
    logits = jax.block_until_ready(fwd(x, kparams))
    assert logits.shape == (N, n_classes)

    # Tight check vs. an emulation of the kernel's own math (bf16 matmul
    # operands, fp32 accumulation, one-pass LN variance).
    ref_bf16 = reference_forward_bf16(x, params)
    np.testing.assert_allclose(np.asarray(logits), np.asarray(ref_bf16),
                               rtol=2e-3, atol=2e-3)

    # Looser check vs. the full-fp32 PyTorch-semantics reference (bf16
    # matmul quantization is the only difference).
    ref_fp32 = reference_forward(x, params)
    np.testing.assert_allclose(np.asarray(logits), np.asarray(ref_fp32),
                               rtol=5e-2, atol=5e-2)
    print("KERNEL_OK")
</pallas_src>

<mosaic_0001>
module attributes {stable_mosaic.version = 11 : i64} {
  func.func @kernel(%arg0: i32, %arg1: memref<160x32xf32, #tpu.memory_space<vmem>>, %arg2: memref<32x128xbf16, #tpu.memory_space<vmem>>, %arg3: memref<1x128xf32, #tpu.memory_space<vmem>>, %arg4: memref<1x128xf32, #tpu.memory_space<vmem>>, %arg5: memref<1x128xf32, #tpu.memory_space<vmem>>, %arg6: memref<128x128xbf16, #tpu.memory_space<vmem>>, %arg7: memref<1x128xf32, #tpu.memory_space<vmem>>, %arg8: memref<1x128xf32, #tpu.memory_space<vmem>>, %arg9: memref<1x128xf32, #tpu.memory_space<vmem>>, %arg10: memref<128x128xbf16, #tpu.memory_space<vmem>>, %arg11: memref<1x128xf32, #tpu.memory_space<vmem>>, %arg12: memref<160x8xf32, #tpu.memory_space<vmem>>) attributes {dimension_semantics = [#tpu.dimension_semantics<parallel>], iteration_bounds = array<i64: 2>, scalar_prefetch = 0 : i64, scratch_operands = 0 : i64, tpu.core_type = #tpu.core_type<tc>, window_params = [{transform_indices = @transform_0, window_bounds = array<i64: 160, 32>}, {pipeline_mode = #tpu.pipeline_mode<synchronous>, transform_indices = @transform_1, window_bounds = array<i64: 32, 128>}, {pipeline_mode = #tpu.pipeline_mode<synchronous>, transform_indices = @transform_2, window_bounds = array<i64: 1, 128>}, {pipeline_mode = #tpu.pipeline_mode<synchronous>, transform_indices = @transform_3, window_bounds = array<i64: 1, 128>}, {pipeline_mode = #tpu.pipeline_mode<synchronous>, transform_indices = @transform_4, window_bounds = array<i64: 1, 128>}, {pipeline_mode = #tpu.pipeline_mode<synchronous>, transform_indices = @transform_5, window_bounds = array<i64: 128, 128>}, {pipeline_mode = #tpu.pipeline_mode<synchronous>, transform_indices = @transform_6, window_bounds = array<i64: 1, 128>}, {pipeline_mode = #tpu.pipeline_mode<synchronous>, transform_indices = @transform_7, window_bounds = array<i64: 1, 128>}, {pipeline_mode = #tpu.pipeline_mode<synchronous>, transform_indices = @transform_8, window_bounds = array<i64: 1, 128>}, {pipeline_mode = #tpu.pipeline_mode<synchronous>, transform_indices = @transform_9, window_bounds = array<i64: 128, 128>}, {pipeline_mode = #tpu.pipeline_mode<synchronous>, transform_indices = @transform_10, window_bounds = array<i64: 1, 128>}, {transform_indices = @transform_11, window_bounds = array<i64: 160, 8>}]} {
    %c0 = arith.constant 0 : index
    %c0_0 = arith.constant 0 : index
    %0 = vector.load %arg1[%c0, %c0_0] : memref<160x32xf32, #tpu.memory_space<vmem>>, vector<160x32xf32>
    %1 = arith.truncf %0 : vector<160x32xf32> to vector<160x32xbf16>
    %c0_1 = arith.constant 0 : index
    %c0_2 = arith.constant 0 : index
    %2 = vector.load %arg2[%c0_1, %c0_2] : memref<32x128xbf16, #tpu.memory_space<vmem>>, vector<32x128xbf16>
    %cst = arith.constant dense<0.000000e+00> : vector<160x128xf32>
    %3 = tpu.matmul %1, %2, %cst {dimension_numbers = #tpu.dot_dimension_numbers<[1], [0], [0], [1], [0, 0, 1, 1], [], []>} : vector<160x32xbf16>, vector<32x128xbf16>, vector<160x128xf32> -> vector<160x128xf32>
    %c0_3 = arith.constant 0 : index
    %c0_4 = arith.constant 0 : index
    %4 = vector.load %arg3[%c0_3, %c0_4] : memref<1x128xf32, #tpu.memory_space<vmem>>, vector<1x128xf32>
    %5 = vector.broadcast %4 : vector<1x128xf32> to vector<160x128xf32>
    %6 = arith.addf %3, %5 : vector<160x128xf32>
    %c0_5 = arith.constant 0 : index
    %c0_6 = arith.constant 0 : index
    %7 = vector.load %arg4[%c0_5, %c0_6] : memref<1x128xf32, #tpu.memory_space<vmem>>, vector<1x128xf32>
    %c0_7 = arith.constant 0 : index
    %c0_8 = arith.constant 0 : index
    %8 = vector.load %arg5[%c0_7, %c0_8] : memref<1x128xf32, #tpu.memory_space<vmem>>, vector<1x128xf32>
    %cst_9 = arith.constant dense<0.000000e+00> : vector<160xf32>
    %9 = vector.multi_reduction <add>, %6, %cst_9 [1] : vector<160x128xf32> to vector<160xf32>
    %10 = vector.shape_cast %9 : vector<160xf32> to vector<160x1xf32>
    %cst_10 = arith.constant 1.562500e-02 : f32
    %11 = vector.broadcast %cst_10 : f32 to vector<160x1xf32>
    %12 = arith.mulf %10, %11 : vector<160x1xf32>
    %13 = arith.mulf %6, %6 : vector<160x128xf32>
    %cst_11 = arith.constant dense<0.000000e+00> : vector<160xf32>
    %14 = vector.multi_reduction <add>, %13, %cst_11 [1] : vector<160x128xf32> to vector<160xf32>
    %15 = vector.shape_cast %14 : vector<160xf32> to vector<160x1xf32>
    %cst_12 = arith.constant 1.562500e-02 : f32
    %16 = vector.broadcast %cst_12 : f32 to vector<160x1xf32>
    %17 = arith.mulf %15, %16 : vector<160x1xf32>
    %18 = arith.mulf %12, %12 : vector<160x1xf32>
    %19 = arith.subf %17, %18 : vector<160x1xf32>
    %cst_13 = arith.constant 0.000000e+00 : f32
    %20 = vector.broadcast %cst_13 : f32 to vector<160x1xf32>
    %21 = arith.maximumf %19, %20 : vector<160x1xf32>
    %22 = vector.broadcast %12 : vector<160x1xf32> to vector<160x128xf32>
    %23 = arith.subf %6, %22 : vector<160x128xf32>
    %cst_14 = arith.constant 9.99999974E-6 : f32
    %24 = vector.broadcast %cst_14 : f32 to vector<160x1xf32>
    %25 = arith.addf %21, %24 : vector<160x1xf32>
    %26 = math.rsqrt %25 : vector<160x1xf32>
    %27 = vector.broadcast %26 : vector<160x1xf32> to vector<160x128xf32>
    %28 = arith.mulf %23, %27 : vector<160x128xf32>
    %29 = vector.broadcast %7 : vector<1x128xf32> to vector<160x128xf32>
    %30 = arith.mulf %28, %29 : vector<160x128xf32>
    %31 = vector.broadcast %8 : vector<1x128xf32> to vector<160x128xf32>
    %32 = arith.addf %30, %31 : vector<160x128xf32>
    %cst_15 = arith.constant 0.000000e+00 : f32
    %33 = vector.broadcast %cst_15 : f32 to vector<160x128xf32>
    %34 = arith.maximumf %32, %33 : vector<160x128xf32>
    %35 = arith.truncf %34 : vector<160x128xf32> to vector<160x128xbf16>
    %c0_16 = arith.constant 0 : index
    %c0_17 = arith.constant 0 : index
    %36 = vector.load %arg6[%c0_16, %c0_17] : memref<128x128xbf16, #tpu.memory_space<vmem>>, vector<128x128xbf16>
    %cst_18 = arith.constant dense<0.000000e+00> : vector<160x128xf32>
    %37 = tpu.matmul %35, %36, %cst_18 {dimension_numbers = #tpu.dot_dimension_numbers<[1], [0], [0], [1], [0, 0, 1, 1], [], []>} : vector<160x128xbf16>, vector<128x128xbf16>, vector<160x128xf32> -> vector<160x128xf32>
    %c0_19 = arith.constant 0 : index
    %c0_20 = arith.constant 0 : index
    %38 = vector.load %arg7[%c0_19, %c0_20] : memref<1x128xf32, #tpu.memory_space<vmem>>, vector<1x128xf32>
    %39 = vector.broadcast %38 : vector<1x128xf32> to vector<160x128xf32>
    %40 = arith.addf %37, %39 : vector<160x128xf32>
    %c0_21 = arith.constant 0 : index
    %c0_22 = arith.constant 0 : index
    %41 = vector.load %arg8[%c0_21, %c0_22] : memref<1x128xf32, #tpu.memory_space<vmem>>, vector<1x128xf32>
    %c0_23 = arith.constant 0 : index
    %c0_24 = arith.constant 0 : index
    %42 = vector.load %arg9[%c0_23, %c0_24] : memref<1x128xf32, #tpu.memory_space<vmem>>, vector<1x128xf32>
    %cst_25 = arith.constant dense<0.000000e+00> : vector<160xf32>
    %43 = vector.multi_reduction <add>, %40, %cst_25 [1] : vector<160x128xf32> to vector<160xf32>
    %44 = vector.shape_cast %43 : vector<160xf32> to vector<160x1xf32>
    %cst_26 = arith.constant 3.125000e-02 : f32
    %45 = vector.broadcast %cst_26 : f32 to vector<160x1xf32>
    %46 = arith.mulf %44, %45 : vector<160x1xf32>
    %47 = arith.mulf %40, %40 : vector<160x128xf32>
    %cst_27 = arith.constant dense<0.000000e+00> : vector<160xf32>
    %48 = vector.multi_reduction <add>, %47, %cst_27 [1] : vector<160x128xf32> to vector<160xf32>
    %49 = vector.shape_cast %48 : vector<160xf32> to vector<160x1xf32>
    %cst_28 = arith.constant 3.125000e-02 : f32
    %50 = vector.broadcast %cst_28 : f32 to vector<160x1xf32>
    %51 = arith.mulf %49, %50 : vector<160x1xf32>
    %52 = arith.mulf %46, %46 : vector<160x1xf32>
    %53 = arith.subf %51, %52 : vector<160x1xf32>
    %cst_29 = arith.constant 0.000000e+00 : f32
    %54 = vector.broadcast %cst_29 : f32 to vector<160x1xf32>
    %55 = arith.maximumf %53, %54 : vector<160x1xf32>
    %56 = vector.broadcast %46 : vector<160x1xf32> to vector<160x128xf32>
    %57 = arith.subf %40, %56 : vector<160x128xf32>
    %cst_30 = arith.constant 9.99999974E-6 : f32
    %58 = vector.broadcast %cst_30 : f32 to vector<160x1xf32>
    %59 = arith.addf %55, %58 : vector<160x1xf32>
    %60 = math.rsqrt %59 : vector<160x1xf32>
    %61 = vector.broadcast %60 : vector<160x1xf32> to vector<160x128xf32>
    %62 = arith.mulf %57, %61 : vector<160x128xf32>
    %63 = vector.broadcast %41 : vector<1x128xf32> to vector<160x128xf32>
    %64 = arith.mulf %62, %63 : vector<160x128xf32>
    %65 = vector.broadcast %42 : vector<1x128xf32> to vector<160x128xf32>
    %66 = arith.addf %64, %65 : vector<160x128xf32>
    %cst_31 = arith.constant 0.000000e+00 : f32
    %67 = vector.broadcast %cst_31 : f32 to vector<160x128xf32>
    %68 = arith.maximumf %66, %67 : vector<160x128xf32>
    %69 = arith.truncf %68 : vector<160x128xf32> to vector<160x128xbf16>
    %c0_32 = arith.constant 0 : index
    %c0_33 = arith.constant 0 : index
    %70 = vector.load %arg10[%c0_32, %c0_33] : memref<128x128xbf16, #tpu.memory_space<vmem>>, vector<128x128xbf16>
    %cst_34 = arith.constant dense<0.000000e+00> : vector<160x128xf32>
    %71 = tpu.matmul %69, %70, %cst_34 {dimension_numbers = #tpu.dot_dimension_numbers<[1], [0], [0], [1], [0, 0, 1, 1], [], []>} : vector<160x128xbf16>, vector<128x128xbf16>, vector<160x128xf32> -> vector<160x128xf32>
    %c0_35 = arith.constant 0 : index
    %c0_36 = arith.constant 0 : index
    %72 = vector.load %arg11[%c0_35, %c0_36] : memref<1x128xf32, #tpu.memory_space<vmem>>, vector<1x128xf32>
    %73 = vector.broadcast %72 : vector<1x128xf32> to vector<160x128xf32>
    %74 = arith.addf %71, %73 : vector<160x128xf32>
    %75 = vector.extract_strided_slice %74 {offsets = [0, 0], sizes = [160, 8], strides = [1, 1]} : vector<160x128xf32> to vector<160x8xf32>
    %c0_37 = arith.constant 0 : index
    %c0_38 = arith.constant 0 : index
    %76 = vector.load %arg12[%c0_37, %c0_38] : memref<160x8xf32, #tpu.memory_space<vmem>>, vector<160x8xf32>
    tpu.vector_store %arg12[%c0_37, %c0_38], %75 {strides = array<i32>} : memref<160x8xf32, #tpu.memory_space<vmem>>, vector<160x8xf32>,
    return
  }
  func.func @transform_0(%arg0: i32) -> (i32, i32) {
    %c0_i32 = arith.constant 0 : i32
    %c0_i32_0 = arith.constant 0 : i32
    return %arg0, %c0_i32 : i32, i32
  }
  func.func @transform_1(%arg0: i32) -> (i32, i32) {
    %c0_i32 = arith.constant 0 : i32
    %c0_i32_0 = arith.constant 0 : i32
    %c0_i32_1 = arith.constant 0 : i32
    return %c0_i32, %c0_i32_0 : i32, i32
  }
  func.func @transform_2(%arg0: i32) -> (i32, i32) {
    %c0_i32 = arith.constant 0 : i32
    %c0_i32_0 = arith.constant 0 : i32
    %c0_i32_1 = arith.constant 0 : i32
    return %c0_i32, %c0_i32_0 : i32, i32
  }
  func.func @transform_3(%arg0: i32) -> (i32, i32) {
    %c0_i32 = arith.constant 0 : i32
    %c0_i32_0 = arith.constant 0 : i32
    %c0_i32_1 = arith.constant 0 : i32
    return %c0_i32, %c0_i32_0 : i32, i32
  }
  func.func @transform_4(%arg0: i32) -> (i32, i32) {
    %c0_i32 = arith.constant 0 : i32
    %c0_i32_0 = arith.constant 0 : i32
    %c0_i32_1 = arith.constant 0 : i32
    return %c0_i32, %c0_i32_0 : i32, i32
  }
  func.func @transform_5(%arg0: i32) -> (i32, i32) {
    %c0_i32 = arith.constant 0 : i32
    %c0_i32_0 = arith.constant 0 : i32
    %c0_i32_1 = arith.constant 0 : i32
    return %c0_i32, %c0_i32_0 : i32, i32
  }
  func.func @transform_6(%arg0: i32) -> (i32, i32) {
    %c0_i32 = arith.constant 0 : i32
    %c0_i32_0 = arith.constant 0 : i32
    %c0_i32_1 = arith.constant 0 : i32
    return %c0_i32, %c0_i32_0 : i32, i32
  }
  func.func @transform_7(%arg0: i32) -> (i32, i32) {
    %c0_i32 = arith.constant 0 : i32
    %c0_i32_0 = arith.constant 0 : i32
    %c0_i32_1 = arith.constant 0 : i32
    return %c0_i32, %c0_i32_0 : i32, i32
  }
  func.func @transform_8(%arg0: i32) -> (i32, i32) {
    %c0_i32 = arith.constant 0 : i32
    %c0_i32_0 = arith.constant 0 : i32
    %c0_i32_1 = arith.constant 0 : i32
    return %c0_i32, %c0_i32_0 : i32, i32
  }
  func.func @transform_9(%arg0: i32) -> (i32, i32) {
    %c0_i32 = arith.constant 0 : i32
    %c0_i32_0 = arith.constant 0 : i32
    %c0_i32_1 = arith.constant 0 : i32
    return %c0_i32, %c0_i32_0 : i32, i32
  }
  func.func @transform_10(%arg0: i32) -> (i32, i32) {
    %c0_i32 = arith.constant 0 : i32
    %c0_i32_0 = arith.constant 0 : i32
    %c0_i32_1 = arith.constant 0 : i32
    return %c0_i32, %c0_i32_0 : i32, i32
  }
  func.func @transform_11(%arg0: i32) -> (i32, i32) {
    %c0_i32 = arith.constant 0 : i32
    %c0_i32_0 = arith.constant 0 : i32
    return %arg0, %c0_i32 : i32, i32
  }
}

</mosaic_0001>

<llo_original>
// kernel: _lambda_.1
$region0: #{_lambda_.1}
  #allocation0 [shape = 'u32[]', space=smem, size = 0x4, offset = 0x4, fixed_abs, tag = 'smem constant byte address 0x4 - core index']
  #allocation1 [shape = 'u32[72,128]{1,0:T(1,128)}', space=vmem, size = 0x9000, scoped, tag = 'internal scratch']
  %s0 = inlined_call_operand.vmem [shape: f32[320,32], index: 0, kind: input, shape index: {}]
  %s1 = inlined_call_operand.vmem [shape: bf16[32,128], index: 1, kind: input, shape index: {}]
  %s2 = inlined_call_operand.vmem [shape: f32[1,128], index: 2, kind: input, shape index: {}]
  %s3 = inlined_call_operand.vmem [shape: f32[1,128], index: 3, kind: input, shape index: {}]
  %s4 = inlined_call_operand.vmem [shape: f32[1,128], index: 4, kind: input, shape index: {}]
  %s5 = inlined_call_operand.vmem [shape: bf16[128,128], index: 5, kind: input, shape index: {}]
  %s6 = inlined_call_operand.vmem [shape: f32[1,128], index: 6, kind: input, shape index: {}]
  %s7 = inlined_call_operand.vmem [shape: f32[1,128], index: 7, kind: input, shape index: {}]
  %s8 = inlined_call_operand.vmem [shape: f32[1,128], index: 8, kind: input, shape index: {}]
  %s9 = inlined_call_operand.vmem [shape: bf16[128,128], index: 9, kind: input, shape index: {}]
  %s10 = inlined_call_operand.vmem [shape: f32[1,128], index: 10, kind: input, shape index: {}]
  %s11 = inlined_call_operand.vmem [shape: f32[320,8], index: 11, kind: output, shape index: {}]
  %s12 = sld [smem:[#allocation0]]
  $region77: #{_lambda_.1} parent=0
    _
  %s14 = ssub.s32 1, %s12
  %s15 = scalar_select 0, %s14, %s12
  loop: start=0, step=1, limit=4
  $region2: #{_lambda_.1} parent=0 // loop_pre_header
    _
  $region3: #{_lambda_.1} parent=0 // loop_header
    %s17 = sphi 0, %s21
    %p18 = scmp.ge.s32.totalorder %s17, 4
    %s27 = sphi 0, %s29
    %s30 = sphi 0, %s27
    %s31 = sphi 0, %s30
    %s47 = sphi 0, %s31
    %s51 = sphi 0, %s51
    %s53 = sphi 0, %s51
    %s54 = sphi 0, %s53
    %s68 = sphi 0, %s54
    %s72 = sphi 0, %s72
    %s74 = sphi 0, %s72
    %s75 = sphi 0, %s74
    %s89 = sphi 0, %s75
    %s93 = sphi 0, %s93
    %s95 = sphi 0, %s93
    %s96 = sphi 0, %s95
    %s110 = sphi 0, %s96
    %s114 = sphi 0, %s114
    %s116 = sphi 0, %s114
    %s117 = sphi 0, %s116
    %s131 = sphi 0, %s117
    %s135 = sphi 0, %s135
    %s137 = sphi 0, %s135
    %s138 = sphi 0, %s137
    %s152 = sphi 0, %s138
    %s156 = sphi 0, %s156
    %s158 = sphi 0, %s156
    %s159 = sphi 0, %s158
    %s173 = sphi 0, %s159
    %s177 = sphi 0, %s177
    %s179 = sphi 0, %s177
    %s180 = sphi 0, %s179
    %s194 = sphi 0, %s180
    %s198 = sphi 0, %s198
    %s200 = sphi 0, %s198
    %s201 = sphi 0, %s200
    %s215 = sphi 0, %s201
    %s219 = sphi 0, %s219
    %s221 = sphi 0, %s219
    %s222 = sphi 0, %s221
    %s236 = sphi 0, %s222
    %s240 = sphi 0, %s240
    %s242 = sphi 0, %s240
    %s243 = sphi 0, %s242
    %s257 = sphi 0, %s243
    %s263 = sphi 0, %s265
    %s266 = sphi 0, %s263
    %s267 = sphi 0, %s266
    %s283 = sphi 0, %s267
  $region4: #{_lambda_.1} parent=0 // loop_header_branch
    %20 = sbr.rel (%p18) target = $region8
  $region5: #{_lambda_.1} parent=0 // loop_body
    %s22 = ssub.s32 %s17, 1
    %s23 = ssub.s32 %s17, 2
    %s24 = sadd.s32 %s17, 1
    %s25 = ssub.s32 %s17, %s24
    %p26 = scmp.eq.s32.totalorder %s25, 0
    %s28 = sadd.s32 %s27, 1
    %s29 = scalar_select %p26, %s27, %s28
    %p32 = pneg %p26
    %p33 = scmp.eq.s32.totalorder %s17, 1
    %p34 = por %p32, %p33
    %p35 = scmp.ne.s32.totalorder %s27, %s30
    %p36 = scmp.eq.s32.totalorder %s17, 0
    %p37 = por %p35, %p36
    %p38 = scmp.ne.s32.totalorder %s27, %s30
    %p39 = scmp.eq.s32.totalorder %s22, 1
    %p40 = por %p38, %p39
    %p41 = scmp.ne.s32.totalorder %s30, %s31
    %p42 = scmp.eq.s32.totalorder %s22, 0
    %p43 = por %p41, %p42
    %p44 = scmp.ne.s32.totalorder %s30, %s31
    %p45 = scmp.eq.s32.totalorder %s23, 1
    %p46 = por %p44, %p45
    %p48 = scmp.ne.s32.totalorder %s31, %s47
    %p49 = scmp.eq.s32.totalorder %s23, 0
    %p50 = por %p48, %p49
    %s52 = sadd.s32 %s51, 1
    %p55 = scmp.eq.s32.totalorder %s17, 1
    %p56 = scmp.ne.s32.totalorder %s51, %s53
    %p57 = scmp.eq.s32.totalorder %s17, 0
    %p58 = por %p56, %p57
    %p59 = scmp.ne.s32.totalorder %s51, %s53
    %p60 = scmp.eq.s32.totalorder %s22, 1
    %p61 = por %p59, %p60
    %p62 = scmp.ne.s32.totalorder %s53, %s54
    %p63 = scmp.eq.s32.totalorder %s22, 0
    %p64 = por %p62, %p63
    %p65 = scmp.ne.s32.totalorder %s53, %s54
    %p66 = scmp.eq.s32.totalorder %s23, 1
    %p67 = por %p65, %p66
    %p69 = scmp.ne.s32.totalorder %s54, %s68
    %p70 = scmp.eq.s32.totalorder %s23, 0
    %p71 = por %p69, %p70
    %s73 = sadd.s32 %s72, 1
    %p76 = scmp.eq.s32.totalorder %s17, 1
    %p77 = scmp.ne.s32.totalorder %s72, %s74
    %p78 = scmp.eq.s32.totalorder %s17, 0
    %p79 = por %p77, %p78
    %p80 = scmp.ne.s32.totalorder %s72, %s74
    %p81 = scmp.eq.s32.totalorder %s22, 1
    %p82 = por %p80, %p81
    %p83 = scmp.ne.s32.totalorder %s74, %s75
    %p84 = scmp.eq.s32.totalorder %s22, 0
    %p85 = por %p83, %p84
    %p86 = scmp.ne.s32.totalorder %s74, %s75
    %p87 = scmp.eq.s32.totalorder %s23, 1
    %p88 = por %p86, %p87
    %p90 = scmp.ne.s32.totalorder %s75, %s89
    %p91 = scmp.eq.s32.totalorder %s23, 0
    %p92 = por %p90, %p91
    %s94 = sadd.s32 %s93, 1
    %p97 = scmp.eq.s32.totalorder %s17, 1
    %p98 = scmp.ne.s32.totalorder %s93, %s95
    %p99 = scmp.eq.s32.totalorder %s17, 0
    %p100 = por %p98, %p99
    %p101 = scmp.ne.s32.totalorder %s93, %s95
    %p102 = scmp.eq.s32.totalorder %s22, 1
    %p103 = por %p101, %p102
    %p104 = scmp.ne.s32.totalorder %s95, %s96
    %p105 = scmp.eq.s32.totalorder %s22, 0
    %p106 = por %p104, %p105
    %p107 = scmp.ne.s32.totalorder %s95, %s96
    %p108 = scmp.eq.s32.totalorder %s23, 1
    %p109 = por %p107, %p108
    %p111 = scmp.ne.s32.totalorder %s96, %s110
    %p112 = scmp.eq.s32.totalorder %s23, 0
    %p113 = por %p111, %p112
    %s115 = sadd.s32 %s114, 1
    %p118 = scmp.eq.s32.totalorder %s17, 1
    %p119 = scmp.ne.s32.totalorder %s114, %s116
    %p120 = scmp.eq.s32.totalorder %s17, 0
    %p121 = por %p119, %p120
    %p122 = scmp.ne.s32.totalorder %s114, %s116
    %p123 = scmp.eq.s32.totalorder %s22, 1
    %p124 = por %p122, %p123
    %p125 = scmp.ne.s32.totalorder %s116, %s117
    %p126 = scmp.eq.s32.totalorder %s22, 0
    %p127 = por %p125, %p126
    %p128 = scmp.ne.s32.totalorder %s116, %s117
    %p129 = scmp.eq.s32.totalorder %s23, 1
    %p130 = por %p128, %p129
    %p132 = scmp.ne.s32.totalorder %s117, %s131
    %p133 = scmp.eq.s32.totalorder %s23, 0
    %p134 = por %p132, %p133
    %s136 = sadd.s32 %s135, 1
    %p139 = scmp.eq.s32.totalorder %s17, 1
    %p140 = scmp.ne.s32.totalorder %s135, %s137
    %p141 = scmp.eq.s32.totalorder %s17, 0
    %p142 = por %p140, %p141
    %p143 = scmp.ne.s32.totalorder %s135, %s137
    %p144 = scmp.eq.s32.totalorder %s22, 1
    %p145 = por %p143, %p144
    %p146 = scmp.ne.s32.totalorder %s137, %s138
    %p147 = scmp.eq.s32.totalorder %s22, 0
    %p148 = por %p146, %p147
    %p149 = scmp.ne.s32.totalorder %s137, %s138
    %p150 = scmp.eq.s32.totalorder %s23, 1
    %p151 = por %p149, %p150
    %p153 = scmp.ne.s32.totalorder %s138, %s152
    %p154 = scmp.eq.s32.totalorder %s23, 0
    %p155 = por %p153, %p154
    %s157 = sadd.s32 %s156, 1
    %p160 = scmp.eq.s32.totalorder %s17, 1
    %p161 = scmp.ne.s32.totalorder %s156, %s158
    %p162 = scmp.eq.s32.totalorder %s17, 0
    %p163 = por %p161, %p162
    %p164 = scmp.ne.s32.totalorder %s156, %s158
    %p165 = scmp.eq.s32.totalorder %s22, 1
    %p166 = por %p164, %p165
    %p167 = scmp.ne.s32.totalorder %s158, %s159
    %p168 = scmp.eq.s32.totalorder %s22, 0
    %p169 = por %p167, %p168
    %p170 = scmp.ne.s32.totalorder %s158, %s159
    %p171 = scmp.eq.s32.totalorder %s23, 1
    %p172 = por %p170, %p171
    %p174 = scmp.ne.s32.totalorder %s159, %s173
    %p175 = scmp.eq.s32.totalorder %s23, 0
    %p176 = por %p174, %p175
    %s178 = sadd.s32 %s177, 1
    %p181 = scmp.eq.s32.totalorder %s17, 1
    %p182 = scmp.ne.s32.totalorder %s177, %s179
    %p183 = scmp.eq.s32.totalorder %s17, 0
    %p184 = por %p182, %p183
    %p185 = scmp.ne.s32.totalorder %s177, %s179
    %p186 = scmp.eq.s32.totalorder %s22, 1
    %p187 = por %p185, %p186
    %p188 = scmp.ne.s32.totalorder %s179, %s180
    %p189 = scmp.eq.s32.totalorder %s22, 0
    %p190 = por %p188, %p189
    %p191 = scmp.ne.s32.totalorder %s179, %s180
    %p192 = scmp.eq.s32.totalorder %s23, 1
    %p193 = por %p191, %p192
    %p195 = scmp.ne.s32.totalorder %s180, %s194
    %p196 = scmp.eq.s32.totalorder %s23, 0
    %p197 = por %p195, %p196
    %s199 = sadd.s32 %s198, 1
    %p202 = scmp.eq.s32.totalorder %s17, 1
    %p203 = scmp.ne.s32.totalorder %s198, %s200
    %p204 = scmp.eq.s32.totalorder %s17, 0
    %p205 = por %p203, %p204
    %p206 = scmp.ne.s32.totalorder %s198, %s200
    %p207 = scmp.eq.s32.totalorder %s22, 1
    %p208 = por %p206, %p207
    %p209 = scmp.ne.s32.totalorder %s200, %s201
    %p210 = scmp.eq.s32.totalorder %s22, 0
    %p211 = por %p209, %p210
    %p212 = scmp.ne.s32.totalorder %s200, %s201
    %p213 = scmp.eq.s32.totalorder %s23, 1
    %p214 = por %p212, %p213
    %p216 = scmp.ne.s32.totalorder %s201, %s215
    %p217 = scmp.eq.s32.totalorder %s23, 0
    %p218 = por %p216, %p217
    %s220 = sadd.s32 %s219, 1
    %p223 = scmp.eq.s32.totalorder %s17, 1
    %p224 = scmp.ne.s32.totalorder %s219, %s221
    %p225 = scmp.eq.s32.totalorder %s17, 0
    %p226 = por %p224, %p225
    %p227 = scmp.ne.s32.totalorder %s219, %s221
    %p228 = scmp.eq.s32.totalorder %s22, 1
    %p229 = por %p227, %p228
    %p230 = scmp.ne.s32.totalorder %s221, %s222
    %p231 = scmp.eq.s32.totalorder %s22, 0
    %p232 = por %p230, %p231
    %p233 = scmp.ne.s32.totalorder %s221, %s222
    %p234 = scmp.eq.s32.totalorder %s23, 1
    %p235 = por %p233, %p234
    %p237 = scmp.ne.s32.totalorder %s222, %s236
    %p238 = scmp.eq.s32.totalorder %s23, 0
    %p239 = por %p237, %p238
    %s241 = sadd.s32 %s240, 1
    %p244 = scmp.eq.s32.totalorder %s17, 1
    %p245 = scmp.ne.s32.totalorder %s240, %s242
    %p246 = scmp.eq.s32.totalorder %s17, 0
    %p247 = por %p245, %p246
    %p248 = scmp.ne.s32.totalorder %s240, %s242
    %p249 = scmp.eq.s32.totalorder %s22, 1
    %p250 = por %p248, %p249
    %p251 = scmp.ne.s32.totalorder %s242, %s243
    %p252 = scmp.eq.s32.totalorder %s22, 0
    %p253 = por %p251, %p252
    %p254 = scmp.ne.s32.totalorder %s242, %s243
    %p255 = scmp.eq.s32.totalorder %s23, 1
    %p256 = por %p254, %p255
    %p258 = scmp.ne.s32.totalorder %s243, %s257
    %p259 = scmp.eq.s32.totalorder %s23, 0
    %p260 = por %p258, %p259
    %s261 = ssub.s32 %s17, %s24
    %p262 = scmp.eq.s32.totalorder %s261, 0
    %s264 = sadd.s32 %s263, 1
    %s265 = scalar_select %p262, %s263, %s264
    %p268 = pneg %p262
    %p269 = scmp.eq.s32.totalorder %s17, 1
    %p270 = por %p268, %p269
    %p271 = scmp.ne.s32.totalorder %s263, %s266
    %p272 = scmp.eq.s32.totalorder %s17, 0
    %p273 = por %p271, %p272
    %p274 = scmp.ne.s32.totalorder %s263, %s266
    %p275 = scmp.eq.s32.totalorder %s22, 1
    %p276 = por %p274, %p275
    %p277 = scmp.ne.s32.totalorder %s266, %s267
    %p278 = scmp.eq.s32.totalorder %s22, 0
    %p279 = por %p277, %p278
    %p280 = scmp.ne.s32.totalorder %s266, %s267
    %p281 = scmp.eq.s32.totalorder %s23, 1
    %p282 = por %p280, %p281
    %p284 = scmp.ne.s32.totalorder %s267, %s283
    %p285 = scmp.eq.s32.totalorder %s23, 0
    %p286 = por %p284, %p285
    %p287 = scmp.le.s32.totalorder 1, %s17
    %p288 = scmp.lt.s32.totalorder %s17, 3
    %p289 = pnand %p287, %p288
    %p290 = pneg %p289
    // Predicated region
    $region9: #{_lambda_.1} parent=5 // pred_check
      _
    $region10: #{_lambda_.1} parent=5 // pred_check_branch
      %292 = sbr.rel (%p289) target = $region12
    $region11: #{_lambda_.1} parent=5 // pred_region
      %s293 = ssub.s32 %s17, 1
      // Predicated region
      $region13: #{_lambda_.1} parent=11 // pred_check
        %p294 = pneg %p64
      $region14: #{_lambda_.1} parent=11 // pred_check_branch
        %296 = sbr.rel (%p294) target = $region16
      $region15: #{_lambda_.1} parent=11 // pred_region
        _
      $region16: #{_lambda_.1} parent=11 // pred_fallthru
        _
      // Predicated region
      $region17: #{_lambda_.1} parent=11 // pred_check
        %p297 = pneg %p85
      $region18: #{_lambda_.1} parent=11 // pred_check_branch
        %299 = sbr.rel (%p297) target = $region20
      $region19: #{_lambda_.1} parent=11 // pred_region
        _
      $region20: #{_lambda_.1} parent=11 // pred_fallthru
        _
      // Predicated region
      $region21: #{_lambda_.1} parent=11 // pred_check
        %p300 = pneg %p106
      $region22: #{_lambda_.1} parent=11 // pred_check_branch
        %302 = sbr.rel (%p300) target = $region24
      $region23: #{_lambda_.1} parent=11 // pred_region
        _
      $region24: #{_lambda_.1} parent=11 // pred_fallthru
        _
      // Predicated region
      $region25: #{_lambda_.1} parent=11 // pred_check
        %p303 = pneg %p127
      $region26: #{_lambda_.1} parent=11 // pred_check_branch
        %305 = sbr.rel (%p303) target = $region28
      $region27: #{_lambda_.1} parent=11 // pred_region
        _
      $region28: #{_lambda_.1} parent=11 // pred_fallthru
        _
      // Predicated region
      $region29: #{_lambda_.1} parent=11 // pred_check
        %p306 = pneg %p148
      $region30: #{_lambda_.1} parent=11 // pred_check_branch
        %308 = sbr.rel (%p306) target = $region32
      $region31: #{_lambda_.1} parent=11 // pred_region
        _
      $region32: #{_lambda_.1} parent=11 // pred_fallthru
        _
      // Predicated region
      $region33: #{_lambda_.1} parent=11 // pred_check
        %p309 = pneg %p169
      $region34: #{_lambda_.1} parent=11 // pred_check_branch
        %311 = sbr.rel (%p309) target = $region36
      $region35: #{_lambda_.1} parent=11 // pred_region
        _
      $region36: #{_lambda_.1} parent=11 // pred_fallthru
        _
      // Predicated region
      $region37: #{_lambda_.1} parent=11 // pred_check
        %p312 = pneg %p190
      $region38: #{_lambda_.1} parent=11 // pred_check_branch
        %314 = sbr.rel (%p312) target = $region40
      $region39: #{_lambda_.1} parent=11 // pred_region
        _
      $region40: #{_lambda_.1} parent=11 // pred_fallthru
        _
      // Predicated region
      $region41: #{_lambda_.1} parent=11 // pred_check
        %p315 = pneg %p211
      $region42: #{_lambda_.1} parent=11 // pred_check_branch
        %317 = sbr.rel (%p315) target = $region44
      $region43: #{_lambda_.1} parent=11 // pred_region
        _
      $region44: #{_lambda_.1} parent=11 // pred_fallthru
        _
      // Predicated region
      $region45: #{_lambda_.1} parent=11 // pred_check
        %p318 = pneg %p232
      $region46: #{_lambda_.1} parent=11 // pred_check_branch
        %320 = sbr.rel (%p318) target = $region48
      $region47: #{_lambda_.1} parent=11 // pred_region
        _
      $region48: #{_lambda_.1} parent=11 // pred_fallthru
        _
      // Predicated region
      $region49: #{_lambda_.1} parent=11 // pred_check
        %p321 = pneg %p253
      $region50: #{_lambda_.1} parent=11 // pred_check_branch
        %323 = sbr.rel (%p321) target = $region52
      $region51: #{_lambda_.1} parent=11 // pred_region
        _
      $region52: #{_lambda_.1} parent=11 // pred_fallthru
        _
    $region12: #{_lambda_.1} parent=5 // pred_fallthru
      _
    %p324 = scmp.lt.s32.totalorder %s17, 2
    // Predicated region
    $region53: #{_lambda_.1} parent=5 // pred_check
      %p325 = pneg %p324
    $region54: #{_lambda_.1} parent=5 // pred_check_branch
      %327 = sbr.rel (%p325) target = $region56
    $region55: #{_lambda_.1} parent=5 // pred_region
      // Predicated region
      $region57: #{_lambda_.1} parent=55 // pred_check
        %p328 = pneg %p37
      $region58: #{_lambda_.1} parent=55 // pred_check_branch
        %330 = sbr.rel (%p328) target = $region60
      $region59: #{_lambda_.1} parent=55 // pred_region
        %s331 = smul.u32 20, %s17
        %p332 = scmp.lt.s32.totalorder %s331, 39
        %s333 = scalar_select %p332, %s331, 39
        %s334 = smul.addr %s333, 8
        %s335 = scalar_lea.vmem %s0, %s334
        %s336 = smul.u32 20, %s17
      $region60: #{_lambda_.1} parent=55 // pred_fallthru
        _
    $region56: #{_lambda_.1} parent=5 // pred_fallthru
      _
    %p337 = scmp.le.s32.totalorder 1, %s17
    %p338 = scmp.lt.s32.totalorder %s17, 3
    %p339 = pnand %p337, %p338
    %p340 = pneg %p339
    // Predicated region
    $region61: #{_lambda_.1} parent=5 // pred_check
      _
    $region62: #{_lambda_.1} parent=5 // pred_check_branch
      %342 = sbr.rel (%p339) target = $region64
    $region63: #{_lambda_.1} parent=5 // pred_region
      %s343 = ssub.s32 %s17, 1
      %s344 = smul.u32 20, %s22
      %p345 = scmp.lt.s32.totalorder %s344, 39
      %s346 = scalar_select %p345, %s344, 39
      %s347 = smul.addr %s346, 8
      %s348 = scalar_lea.vmem %s0, %s347
      %p349 = pneg %p43
      %p350 = pneg %p40
      %p351 = pneg %p64
      %p352 = pneg %p61
      %p353 = pneg %p85
      %p354 = pneg %p82
      %p355 = pneg %p106
      %p356 = pneg %p103
      %p357 = pneg %p127
      %p358 = pneg %p124
      %p359 = pneg %p148
      %p360 = pneg %p145
      %p361 = pneg %p169
      %p362 = pneg %p166
      %p363 = pneg %p190
      %p364 = pneg %p187
      %p365 = pneg %p211
      %p366 = pneg %p208
      %p367 = pneg %p232
      %p368 = pneg %p229
      %p369 = pneg %p253
      %p370 = pneg %p250
      %p371 = pneg %p279
      %p372 = pneg %p276
      %s373 = smul.u32 20, %s22
      %p374 = scmp.lt.s32.totalorder %s373, 39
      %s375 = scalar_select %p374, %s373, 39
      %s376 = smul.addr %s375, 8
      %s377 = scalar_lea.vmem %s11, %s376
      %s378 = smul.u32 20, %s22
      %p379 = scmp.lt.s32.totalorder %s378, 39
      %s380 = scalar_select %p379, %s378, 39
      %s381 = smul.addr %s380, 8
      %s382 = scalar_lea.vmem %s0, %s381
      %s383 = smul.u32 20, %s22
      %s384 = smul.u32 20, %s22
      %p385 = scmp.lt.s32.totalorder %s384, 39
      %s386 = scalar_select %p385, %s384, 39
      %s387 = smul.addr %s386, 8
      %s388 = scalar_lea.vmem %s11, %s387
      %s389 = smul.u32 20, %s22
      %v391 = vld [vmem:[%s382] sm:$0xff]
      %v392 = vld [vmem:[%s382 + $0x8] sm:$0xff]
      %v393 = vld [vmem:[%s382 + $0x10] sm:$0xff]
      %v394 = vld [vmem:[%s382 + $0x18] sm:$0xff]
      %v395 = vld [vmem:[%s382 + $0x20] sm:$0xff]
      %v396 = vld [vmem:[%s382 + $0x28] sm:$0xff]
      %v397 = vld [vmem:[%s382 + $0x30] sm:$0xff]
      %v398 = vld [vmem:[%s382 + $0x38] sm:$0xff]
      %v399 = vld [vmem:[%s382 + $0x40] sm:$0xff]
      %v400 = vld [vmem:[%s382 + $0x48] sm:$0xff]
      %v401 = vld [vmem:[%s382 + $0x50] sm:$0xff]
      %v402 = vld [vmem:[%s382 + $0x58] sm:$0xff]
      %v403 = vld [vmem:[%s382 + $0x60] sm:$0xff]
      %v404 = vld [vmem:[%s382 + $0x68] sm:$0xff]
      %v405 = vld [vmem:[%s382 + $0x70] sm:$0xff]
      %v406 = vld [vmem:[%s382 + $0x78] sm:$0xff]
      %v407 = vld [vmem:[%s382 + $0x80] sm:$0xff]
      %v408 = vld [vmem:[%s382 + $0x88] sm:$0xff]
      %v409 = vld [vmem:[%s382 + $0x90] sm:$0xff]
      %v410 = vld [vmem:[%s382 + $0x98] sm:$0xff]
      %v411 = vpack.c.bf16 %v392, %v391
      %v412 = vpack.c.bf16 %v394, %v393
      %v413 = vpack.c.bf16 %v396, %v395
      %v414 = vpack.c.bf16 %v398, %v397
      %v415 = vpack.c.bf16 %v400, %v399
      %v416 = vpack.c.bf16 %v402, %v401
      %v417 = vpack.c.bf16 %v404, %v403
      %v418 = vpack.c.bf16 %v406, %v405
      %v419 = vpack.c.bf16 %v408, %v407
      %v420 = vpack.c.bf16 %v410, %v409
      %v421 = vld [vmem:[%s1] sm:$0xf]
      %v422 = vld [vmem:[%s1 + $0x4] sm:$0xf]
      %v423 = vld [vmem:[%s1 + $0x8] sm:$0xf]
      %v424 = vld [vmem:[%s1 + $0xc] sm:$0xf]
      %v425 = vld [vmem:[%s2] sm:$0x1]
      %v427 = vperm.slane %v425, 0
      %v433 = vunpack.c.l.b16 %v421
      %v434 = vunpack.c.l.b16 %v422
      %v435 = vunpack.c.l.b16 %v423
      %v436 = vunpack.c.l.b16 %v424
      %v437 = vpack.c.b16 %v434, %v433
      %v438 = vpack.c.b16 %v436, %v435
      %vm441 = vcmask 261120
      %v443 = vsel %vm441, %v411, 0
      %v446 = vsel %vm441, %v412, 0
      %v449 = vsel %vm441, %v413, 0
      %v452 = vsel %vm441, %v414, 0
      %v455 = vsel %vm441, %v415, 0
      %v458 = vsel %vm441, %v416, 0
      %v461 = vsel %vm441, %v417, 0
      %v464 = vsel %vm441, %v418, 0
      %v467 = vsel %vm441, %v419, 0
      %v470 = vsel %vm441, %v420, 0
      %472 = vmatpush.bf16.msra.mxu0 0
      %473 = vmatpush.bf16.msra.mxu0 0
      %474 = vmatpush.bf16.msra.mxu0 0
      %475 = vmatpush.bf16.msra.mxu0 0
      %476 = vmatpush.bf16.msra.mxu0 0
      %477 = vmatpush.bf16.msra.mxu0 0
      %478 = vmatpush.bf16.msra.mxu0 %v438
      %479 = vmatpush.bf16.msra.mxu0 %v437
      %480 = vmatmul.bf16.gmra.mxu0 %v443
      %v481 = vpop.f32.mrf.mxu0
      %v482 = vadd.f32 %v427, %v481
      %v483 = vpop.f32.mrf.mxu0
      %v484 = vadd.f32 %v427, %v483
      %485 = vmatmul.bf16.gmra.mxu0 %v446
      %v486 = vpop.f32.mrf.mxu0
      %v487 = vadd.f32 %v427, %v486
      %v488 = vpop.f32.mrf.mxu0
      %v489 = vadd.f32 %v427, %v488
      %490 = vmatmul.bf16.gmra.mxu0 %v449
      %v491 = vpop.f32.mrf.mxu0
      %v492 = vadd.f32 %v427, %v491
      %v493 = vpop.f32.mrf.mxu0
      %v494 = vadd.f32 %v427, %v493
      %495 = vmatmul.bf16.gmra.mxu0 %v452
      %v496 = vpop.f32.mrf.mxu0
      %v497 = vadd.f32 %v427, %v496
      %v498 = vpop.f32.mrf.mxu0
      %v499 = vadd.f32 %v427, %v498
      %500 = vmatmul.bf16.gmra.mxu0 %v455
      %v501 = vpop.f32.mrf.mxu0
      %v502 = vadd.f32 %v427, %v501
      %v503 = vpop.f32.mrf.mxu0
      %v504 = vadd.f32 %v427, %v503
      %505 = vmatmul.bf16.gmra.mxu0 %v458
      %v506 = vpop.f32.mrf.mxu0
      %v507 = vadd.f32 %v427, %v506
      %v508 = vpop.f32.mrf.mxu0
      %v509 = vadd.f32 %v427, %v508
      %510 = vmatmul.bf16.gmra.mxu0 %v461
      %v511 = vpop.f32.mrf.mxu0
      %v512 = vadd.f32 %v427, %v511
      %v513 = vpop.f32.mrf.mxu0
      %v514 = vadd.f32 %v427, %v513
      %515 = vmatmul.bf16.gmra.mxu0 %v464
      %v516 = vpop.f32.mrf.mxu0
      %v517 = vadd.f32 %v427, %v516
      %v518 = vpop.f32.mrf.mxu0
      %v519 = vadd.f32 %v427, %v518
      %520 = vmatmul.bf16.gmra.mxu0 %v467
      %v521 = vpop.f32.mrf.mxu0
      %v522 = vadd.f32 %v427, %v521
      %v523 = vpop.f32.mrf.mxu0
      %v524 = vadd.f32 %v427, %v523
      %525 = vmatmul.bf16.gmra.mxu0 %v470
      %v526 = vpop.f32.mrf.mxu0
      %v527 = vadd.f32 %v427, %v526
      %v528 = vpop.f32.mrf.mxu0
      %v529 = vadd.f32 %v427, %v528
      %530 = vdwg.mxu0
      %v531 = vld [vmem:[%s3] sm:$0x1]
      %v532 = vld [vmem:[%s4] sm:$0x1]
      %533 = vadd.xlane.f32.xlu0 %v482
      %v534 = vpop.xlane.xlu0 %533
      %535 = vadd.xlane.f32.xlu0 %v484
      %v536 = vpop.xlane.xlu0 %535
      %537 = vadd.xlane.f32.xlu0 %v487
      %v538 = vpop.xlane.xlu0 %537
      %539 = vadd.xlane.f32.xlu0 %v489
      %v540 = vpop.xlane.xlu0 %539
      %541 = vadd.xlane.f32.xlu0 %v492
      %v542 = vpop.xlane.xlu0 %541
      %543 = vadd.xlane.f32.xlu0 %v494
      %v544 = vpop.xlane.xlu0 %543
      %545 = vadd.xlane.f32.xlu0 %v497
      %v546 = vpop.xlane.xlu0 %545
      %547 = vadd.xlane.f32.xlu0 %v499
      %v548 = vpop.xlane.xlu0 %547
      %549 = vadd.xlane.f32.xlu0 %v502
      %v550 = vpop.xlane.xlu0 %549
      %551 = vadd.xlane.f32.xlu0 %v504
      %v552 = vpop.xlane.xlu0 %551
      %553 = vadd.xlane.f32.xlu0 %v507
      %v554 = vpop.xlane.xlu0 %553
      %555 = vadd.xlane.f32.xlu0 %v509
      %v556 = vpop.xlane.xlu0 %555
      %557 = vadd.xlane.f32.xlu0 %v512
      %v558 = vpop.xlane.xlu0 %557
      %559 = vadd.xlane.f32.xlu0 %v514
      %v560 = vpop.xlane.xlu0 %559
      %561 = vadd.xlane.f32.xlu0 %v517
      %v562 = vpop.xlane.xlu0 %561
      %563 = vadd.xlane.f32.xlu0 %v519
      %v564 = vpop.xlane.xlu0 %563
      %565 = vadd.xlane.f32.xlu0 %v522
      %v566 = vpop.xlane.xlu0 %565
      %567 = vadd.xlane.f32.xlu0 %v524
      %v568 = vpop.xlane.xlu0 %567
      %569 = vadd.xlane.f32.xlu0 %v527
      %v570 = vpop.xlane.xlu0 %569
      %571 = vadd.xlane.f32.xlu0 %v529
      %v572 = vpop.xlane.xlu0 %571
      %v573 = vmul.f32 %v534, 0.015625
      %v574 = vmul.f32 %v536, 0.015625
      %v575 = vmul.f32 %v538, 0.015625
      %v576 = vmul.f32 %v540, 0.015625
      %v577 = vmul.f32 %v542, 0.015625
      %v578 = vmul.f32 %v544, 0.015625
      %v579 = vmul.f32 %v546, 0.015625
      %v580 = vmul.f32 %v548, 0.015625
      %v581 = vmul.f32 %v550, 0.015625
      %v582 = vmul.f32 %v552, 0.015625
      %v583 = vmul.f32 %v554, 0.015625
      %v584 = vmul.f32 %v556, 0.015625
      %v585 = vmul.f32 %v558, 0.015625
      %v586 = vmul.f32 %v560, 0.015625
      %v587 = vmul.f32 %v562, 0.015625
      %v588 = vmul.f32 %v564, 0.015625
      %v589 = vmul.f32 %v566, 0.015625
      %v590 = vmul.f32 %v568, 0.015625
      %v591 = vmul.f32 %v570, 0.015625
      %v592 = vmul.f32 %v572, 0.015625
      %v593 = vmul.f32 %v482, %v482
      %v594 = vmul.f32 %v484, %v484
      %v595 = vmul.f32 %v487, %v487
      %v596 = vmul.f32 %v489, %v489
      %v597 = vmul.f32 %v492, %v492
      %v598 = vmul.f32 %v494, %v494
      %v599 = vmul.f32 %v497, %v497
      %v600 = vmul.f32 %v499, %v499
      %v601 = vmul.f32 %v502, %v502
      %v602 = vmul.f32 %v504, %v504
      %v603 = vmul.f32 %v507, %v507
      %v604 = vmul.f32 %v509, %v509
      %v605 = vmul.f32 %v512, %v512
      %v606 = vmul.f32 %v514, %v514
      %v607 = vmul.f32 %v517, %v517
      %v608 = vmul.f32 %v519, %v519
      %v609 = vmul.f32 %v522, %v522
      %v610 = vmul.f32 %v524, %v524
      %v611 = vmul.f32 %v527, %v527
      %v612 = vmul.f32 %v529, %v529
      %613 = vadd.xlane.f32.xlu0 %v593
      %v614 = vpop.xlane.xlu0 %613
      %615 = vadd.xlane.f32.xlu0 %v594
      %v616 = vpop.xlane.xlu0 %615
      %617 = vadd.xlane.f32.xlu0 %v595
      %v618 = vpop.xlane.xlu0 %617
      %619 = vadd.xlane.f32.xlu0 %v596
      %v620 = vpop.xlane.xlu0 %619
      %621 = vadd.xlane.f32.xlu0 %v597
      %v622 = vpop.xlane.xlu0 %621
      %623 = vadd.xlane.f32.xlu0 %v598
      %v624 = vpop.xlane.xlu0 %623
      %625 = vadd.xlane.f32.xlu0 %v599
      %v626 = vpop.xlane.xlu0 %625
      %627 = vadd.xlane.f32.xlu0 %v600
      %v628 = vpop.xlane.xlu0 %627
      %629 = vadd.xlane.f32.xlu0 %v601
      %v630 = vpop.xlane.xlu0 %629
      %631 = vadd.xlane.f32.xlu0 %v602
      %v632 = vpop.xlane.xlu0 %631
      %633 = vadd.xlane.f32.xlu0 %v603
      %v634 = vpop.xlane.xlu0 %633
      %635 = vadd.xlane.f32.xlu0 %v604
      %v636 = vpop.xlane.xlu0 %635
      %637 = vadd.xlane.f32.xlu0 %v605
      %v638 = vpop.xlane.xlu0 %637
      %639 = vadd.xlane.f32.xlu0 %v606
      %v640 = vpop.xlane.xlu0 %639
      %641 = vadd.xlane.f32.xlu0 %v607
      %v642 = vpop.xlane.xlu0 %641
      %643 = vadd.xlane.f32.xlu0 %v608
      %v644 = vpop.xlane.xlu0 %643
      %645 = vadd.xlane.f32.xlu0 %v609
      %v646 = vpop.xlane.xlu0 %645
      %647 = vadd.xlane.f32.xlu0 %v610
      %v648 = vpop.xlane.xlu0 %647
      %649 = vadd.xlane.f32.xlu0 %v611
      %v650 = vpop.xlane.xlu0 %649
      %651 = vadd.xlane.f32.xlu0 %v612
      %v652 = vpop.xlane.xlu0 %651
      %v653 = vmul.f32 %v614, 0.015625
      %v654 = vmul.f32 %v616, 0.015625
      %v655 = vmul.f32 %v618, 0.015625
      %v656 = vmul.f32 %v620, 0.015625
      %v657 = vmul.f32 %v622, 0.015625
      %v658 = vmul.f32 %v624, 0.015625
      %v659 = vmul.f32 %v626, 0.015625
      %v660 = vmul.f32 %v628, 0.015625
      %v661 = vmul.f32 %v630, 0.015625
      %v662 = vmul.f32 %v632, 0.015625
      %v663 = vmul.f32 %v634, 0.015625
      %v664 = vmul.f32 %v636, 0.015625
      %v665 = vmul.f32 %v638, 0.015625
      %v666 = vmul.f32 %v640, 0.015625
      %v667 = vmul.f32 %v642, 0.015625
      %v668 = vmul.f32 %v644, 0.015625
      %v669 = vmul.f32 %v646, 0.015625
      %v670 = vmul.f32 %v648, 0.015625
      %v671 = vmul.f32 %v650, 0.015625
      %v672 = vmul.f32 %v652, 0.015625
      %v673 = vmul.f32 %v573, %v573
      %v674 = vmul.f32 %v574, %v574
      %v675 = vmul.f32 %v575, %v575
      %v676 = vmul.f32 %v576, %v576
      %v677 = vmul.f32 %v577, %v577
      %v678 = vmul.f32 %v578, %v578
      %v679 = vmul.f32 %v579, %v579
      %v680 = vmul.f32 %v580, %v580
      %v681 = vmul.f32 %v581, %v581
      %v682 = vmul.f32 %v582, %v582
      %v683 = vmul.f32 %v583, %v583
      %v684 = vmul.f32 %v584, %v584
      %v685 = vmul.f32 %v585, %v585
      %v686 = vmul.f32 %v586, %v586
      %v687 = vmul.f32 %v587, %v587
      %v688 = vmul.f32 %v588, %v588
      %v689 = vmul.f32 %v589, %v589
      %v690 = vmul.f32 %v590, %v590
      %v691 = vmul.f32 %v591, %v591
      %v692 = vmul.f32 %v592, %v592
      %v693 = vsub.f32 %v653, %v673
      %v694 = vsub.f32 %v654, %v674
      %v695 = vsub.f32 %v655, %v675
      %v696 = vsub.f32 %v656, %v676
      %v697 = vsub.f32 %v657, %v677
      %v698 = vsub.f32 %v658, %v678
      %v699 = vsub.f32 %v659, %v679
      %v700 = vsub.f32 %v660, %v680
      %v701 = vsub.f32 %v661, %v681
      %v702 = vsub.f32 %v662, %v682
      %v703 = vsub.f32 %v663, %v683
      %v704 = vsub.f32 %v664, %v684
      %v705 = vsub.f32 %v665, %v685
      %v706 = vsub.f32 %v666, %v686
      %v707 = vsub.f32 %v667, %v687
      %v708 = vsub.f32 %v668, %v688
      %v709 = vsub.f32 %v669, %v689
      %v710 = vsub.f32 %v670, %v690
      %v711 = vsub.f32 %v671, %v691
      %v712 = vsub.f32 %v672, %v692
      %v713 = vmax.f32 %v693, 0.0
      %v714 = vmax.f32 %v694, 0.0
      %v715 = vmax.f32 %v695, 0.0
      %v716 = vmax.f32 %v696, 0.0
      %v717 = vmax.f32 %v697, 0.0
      %v718 = vmax.f32 %v698, 0.0
      %v719 = vmax.f32 %v699, 0.0
      %v720 = vmax.f32 %v700, 0.0
      %v721 = vmax.f32 %v701, 0.0
      %v722 = vmax.f32 %v702, 0.0
      %v723 = vmax.f32 %v703, 0.0
      %v724 = vmax.f32 %v704, 0.0
      %v725 = vmax.f32 %v705, 0.0
      %v726 = vmax.f32 %v706, 0.0
      %v727 = vmax.f32 %v707, 0.0
      %v728 = vmax.f32 %v708, 0.0
      %v729 = vmax.f32 %v709, 0.0
      %v730 = vmax.f32 %v710, 0.0
      %v731 = vmax.f32 %v711, 0.0
      %v732 = vmax.f32 %v712, 0.0
      %v733 = vsub.f32 %v482, %v573
      %v734 = vsub.f32 %v484, %v574
      %v735 = vsub.f32 %v487, %v575
      %v736 = vsub.f32 %v489, %v576
      %v737 = vsub.f32 %v492, %v577
      %v738 = vsub.f32 %v494, %v578
      %v739 = vsub.f32 %v497, %v579
      %v740 = vsub.f32 %v499, %v580
      %v741 = vsub.f32 %v502, %v581
      %v742 = vsub.f32 %v504, %v582
      %v743 = vsub.f32 %v507, %v583
      %v744 = vsub.f32 %v509, %v584
      %v745 = vsub.f32 %v512, %v585
      %v746 = vsub.f32 %v514, %v586
      %v747 = vsub.f32 %v517, %v587
      %v748 = vsub.f32 %v519, %v588
      %v749 = vsub.f32 %v522, %v589
      %v750 = vsub.f32 %v524, %v590
      %v751 = vsub.f32 %v527, %v591
      %v752 = vsub.f32 %v529, %v592
      %v753 = vadd.f32 %v713, 1e-05
      %v754 = vadd.f32 %v714, 1e-05
      %v755 = vadd.f32 %v715, 1e-05
      %v756 = vadd.f32 %v716, 1e-05
      %v757 = vadd.f32 %v717, 1e-05
      %v758 = vadd.f32 %v718, 1e-05
      %v759 = vadd.f32 %v719, 1e-05
      %v760 = vadd.f32 %v720, 1e-05
      %v761 = vadd.f32 %v721, 1e-05
      %v762 = vadd.f32 %v722, 1e-05
      %v763 = vadd.f32 %v723, 1e-05
      %v764 = vadd.f32 %v724, 1e-05
      %v765 = vadd.f32 %v725, 1e-05
      %v766 = vadd.f32 %v726, 1e-05
      %v767 = vadd.f32 %v727, 1e-05
      %v768 = vadd.f32 %v728, 1e-05
      %v769 = vadd.f32 %v729, 1e-05
      %v770 = vadd.f32 %v730, 1e-05
      %v771 = vadd.f32 %v731, 1e-05
      %v772 = vadd.f32 %v732, 1e-05
      %v773 = vrsqrt.pop %v753
      %v774 = vmul.f32 %v773, %v753
      %v775 = vmul.f32 %v774, %v773
      %v776 = vmul.f32 0.5, %v775
      %v777 = vsub.f32 1.5, %v776
      %v778 = vmul.f32 %v773, %v777
      %vm779 = vweird.f32 %v753
      %vm780 = vweird.f32 %v773
      %vm781 = vmor %vm779, %vm780
      %v782 = vsel %vm781, %v773, %v778
      %v783 = vrsqrt.pop %v754
      %v784 = vmul.f32 %v783, %v754
      %v785 = vmul.f32 %v784, %v783
      %v786 = vmul.f32 0.5, %v785
      %v787 = vsub.f32 1.5, %v786
      %v788 = vmul.f32 %v783, %v787
      %vm789 = vweird.f32 %v754
      %vm790 = vweird.f32 %v783
      %vm791 = vmor %vm789, %vm790
      %v792 = vsel %vm791, %v783, %v788
      %v793 = vrsqrt.pop %v755
      %v794 = vmul.f32 %v793, %v755
      %v795 = vmul.f32 %v794, %v793
      %v796 = vmul.f32 0.5, %v795
      %v797 = vsub.f32 1.5, %v796
      %v798 = vmul.f32 %v793, %v797
      %vm799 = vweird.f32 %v755
      %vm800 = vweird.f32 %v793
      %vm801 = vmor %vm799, %vm800
      %v802 = vsel %vm801, %v793, %v798
      %v803 = vrsqrt.pop %v756
      %v804 = vmul.f32 %v803, %v756
      %v805 = vmul.f32 %v804, %v803
      %v806 = vmul.f32 0.5, %v805
      %v807 = vsub.f32 1.5, %v806
      %v808 = vmul.f32 %v803, %v807
      %vm809 = vweird.f32 %v756
      %vm810 = vweird.f32 %v803
      %vm811 = vmor %vm809, %vm810
      %v812 = vsel %vm811, %v803, %v808
      %v813 = vrsqrt.pop %v757
      %v814 = vmul.f32 %v813, %v757
      %v815 = vmul.f32 %v814, %v813
      %v816 = vmul.f32 0.5, %v815
      %v817 = vsub.f32 1.5, %v816
      %v818 = vmul.f32 %v813, %v817
      %vm819 = vweird.f32 %v757
      %vm820 = vweird.f32 %v813
      %vm821 = vmor %vm819, %vm820
      %v822 = vsel %vm821, %v813, %v818
      %v823 = vrsqrt.pop %v758
      %v824 = vmul.f32 %v823, %v758
      %v825 = vmul.f32 %v824, %v823
      %v826 = vmul.f32 0.5, %v825
      %v827 = vsub.f32 1.5, %v826
      %v828 = vmul.f32 %v823, %v827
      %vm829 = vweird.f32 %v758
      %vm830 = vweird.f32 %v823
      %vm831 = vmor %vm829, %vm830
      %v832 = vsel %vm831, %v823, %v828
      %v833 = vrsqrt.pop %v759
      %v834 = vmul.f32 %v833, %v759
      %v835 = vmul.f32 %v834, %v833
      %v836 = vmul.f32 0.5, %v835
      %v837 = vsub.f32 1.5, %v836
      %v838 = vmul.f32 %v833, %v837
      %vm839 = vweird.f32 %v759
      %vm840 = vweird.f32 %v833
      %vm841 = vmor %vm839, %vm840
      %v842 = vsel %vm841, %v833, %v838
      %v843 = vrsqrt.pop %v760
      %v844 = vmul.f32 %v843, %v760
      %v845 = vmul.f32 %v844, %v843
      %v846 = vmul.f32 0.5, %v845
      %v847 = vsub.f32 1.5, %v846
      %v848 = vmul.f32 %v843, %v847
      %vm849 = vweird.f32 %v760
      %vm850 = vweird.f32 %v843
      %vm851 = vmor %vm849, %vm850
      %v852 = vsel %vm851, %v843, %v848
      %v853 = vrsqrt.pop %v761
      %v854 = vmul.f32 %v853, %v761
      %v855 = vmul.f32 %v854, %v853
      %v856 = vmul.f32 0.5, %v855
      %v857 = vsub.f32 1.5, %v856
      %v858 = vmul.f32 %v853, %v857
      %vm859 = vweird.f32 %v761
      %vm860 = vweird.f32 %v853
      %vm861 = vmor %vm859, %vm860
      %v862 = vsel %vm861, %v853, %v858
      %v863 = vrsqrt.pop %v762
      %v864 = vmul.f32 %v863, %v762
      %v865 = vmul.f32 %v864, %v863
      %v866 = vmul.f32 0.5, %v865
      %v867 = vsub.f32 1.5, %v866
      %v868 = vmul.f32 %v863, %v867
      %vm869 = vweird.f32 %v762
      %vm870 = vweird.f32 %v863
      %vm871 = vmor %vm869, %vm870
      %v872 = vsel %vm871, %v863, %v868
      %v873 = vrsqrt.pop %v763
      %v874 = vmul.f32 %v873, %v763
      %v875 = vmul.f32 %v874, %v873
      %v876 = vmul.f32 0.5, %v875
      %v877 = vsub.f32 1.5, %v876
      %v878 = vmul.f32 %v873, %v877
      %vm879 = vweird.f32 %v763
      %vm880 = vweird.f32 %v873
      %vm881 = vmor %vm879, %vm880
      %v882 = vsel %vm881, %v873, %v878
      %v883 = vrsqrt.pop %v764
      %v884 = vmul.f32 %v883, %v764
      %v885 = vmul.f32 %v884, %v883
      %v886 = vmul.f32 0.5, %v885
      %v887 = vsub.f32 1.5, %v886
      %v888 = vmul.f32 %v883, %v887
      %vm889 = vweird.f32 %v764
      %vm890 = vweird.f32 %v883
      %vm891 = vmor %vm889, %vm890
      %v892 = vsel %vm891, %v883, %v888
      %v893 = vrsqrt.pop %v765
      %v894 = vmul.f32 %v893, %v765
      %v895 = vmul.f32 %v894, %v893
      %v896 = vmul.f32 0.5, %v895
      %v897 = vsub.f32 1.5, %v896
      %v898 = vmul.f32 %v893, %v897
      %vm899 = vweird.f32 %v765
      %vm900 = vweird.f32 %v893
      %vm901 = vmor %vm899, %vm900
      %v902 = vsel %vm901, %v893, %v898
      %v903 = vrsqrt.pop %v766
      %v904 = vmul.f32 %v903, %v766
      %v905 = vmul.f32 %v904, %v903
      %v906 = vmul.f32 0.5, %v905
      %v907 = vsub.f32 1.5, %v906
      %v908 = vmul.f32 %v903, %v907
      %vm909 = vweird.f32 %v766
      %vm910 = vweird.f32 %v903
      %vm911 = vmor %vm909, %vm910
      %v912 = vsel %vm911, %v903, %v908
      %v913 = vrsqrt.pop %v767
      %v914 = vmul.f32 %v913, %v767
      %v915 = vmul.f32 %v914, %v913
      %v916 = vmul.f32 0.5, %v915
      %v917 = vsub.f32 1.5, %v916
      %v918 = vmul.f32 %v913, %v917
      %vm919 = vweird.f32 %v767
      %vm920 = vweird.f32 %v913
      %vm921 = vmor %vm919, %vm920
      %v922 = vsel %vm921, %v913, %v918
      %v923 = vrsqrt.pop %v768
      %v924 = vmul.f32 %v923, %v768
      %v925 = vmul.f32 %v924, %v923
      %v926 = vmul.f32 0.5, %v925
      %v927 = vsub.f32 1.5, %v926
      %v928 = vmul.f32 %v923, %v927
      %vm929 = vweird.f32 %v768
      %vm930 = vweird.f32 %v923
      %vm931 = vmor %vm929, %vm930
      %v932 = vsel %vm931, %v923, %v928
      %v933 = vrsqrt.pop %v769
      %v934 = vmul.f32 %v933, %v769
      %v935 = vmul.f32 %v934, %v933
      %v936 = vmul.f32 0.5, %v935
      %v937 = vsub.f32 1.5, %v936
      %v938 = vmul.f32 %v933, %v937
      %vm939 = vweird.f32 %v769
      %vm940 = vweird.f32 %v933
      %vm941 = vmor %vm939, %vm940
      %v942 = vsel %vm941, %v933, %v938
      %v943 = vrsqrt.pop %v770
      %v944 = vmul.f32 %v943, %v770
      %v945 = vmul.f32 %v944, %v943
      %v946 = vmul.f32 0.5, %v945
      %v947 = vsub.f32 1.5, %v946
      %v948 = vmul.f32 %v943, %v947
      %vm949 = vweird.f32 %v770
      %vm950 = vweird.f32 %v943
      %vm951 = vmor %vm949, %vm950
      %v952 = vsel %vm951, %v943, %v948
      %v953 = vrsqrt.pop %v771
      %v954 = vmul.f32 %v953, %v771
      %v955 = vmul.f32 %v954, %v953
      %v956 = vmul.f32 0.5, %v955
      %v957 = vsub.f32 1.5, %v956
      %v958 = vmul.f32 %v953, %v957
      %vm959 = vweird.f32 %v771
      %vm960 = vweird.f32 %v953
      %vm961 = vmor %vm959, %vm960
      %v962 = vsel %vm961, %v953, %v958
      %v963 = vrsqrt.pop %v772
      %v964 = vmul.f32 %v963, %v772
      %v965 = vmul.f32 %v964, %v963
      %v966 = vmul.f32 0.5, %v965
      %v967 = vsub.f32 1.5, %v966
      %v968 = vmul.f32 %v963, %v967
      %vm969 = vweird.f32 %v772
      %vm970 = vweird.f32 %v963
      %vm971 = vmor %vm969, %vm970
      %v972 = vsel %vm971, %v963, %v968
      %v973 = vmul.f32 %v733, %v782
      %v974 = vmul.f32 %v734, %v792
      %v975 = vmul.f32 %v735, %v802
      %v976 = vmul.f32 %v736, %v812
      %v977 = vmul.f32 %v737, %v822
      %v978 = vmul.f32 %v738, %v832
      %v979 = vmul.f32 %v739, %v842
      %v980 = vmul.f32 %v740, %v852
      %v981 = vmul.f32 %v741, %v862
      %v982 = vmul.f32 %v742, %v872
      %v983 = vmul.f32 %v743, %v882
      %v984 = vmul.f32 %v744, %v892
      %v985 = vmul.f32 %v745, %v902
      %v986 = vmul.f32 %v746, %v912
      %v987 = vmul.f32 %v747, %v922
      %v988 = vmul.f32 %v748, %v932
      %v989 = vmul.f32 %v749, %v942
      %v990 = vmul.f32 %v750, %v952
      %v991 = vmul.f32 %v751, %v962
      %v992 = vmul.f32 %v752, %v972
      %v994 = vperm.slane %v531, 0
      %v996 = vmul.f32 %v973, %v994
      %v997 = vmul.f32 %v974, %v994
      %v998 = vmul.f32 %v975, %v994
      %v999 = vmul.f32 %v976, %v994
      %v1000 = vmul.f32 %v977, %v994
      %v1001 = vmul.f32 %v978, %v994
      %v1002 = vmul.f32 %v979, %v994
      %v1003 = vmul.f32 %v980, %v994
      %v1004 = vmul.f32 %v981, %v994
      %v1005 = vmul.f32 %v982, %v994
      %v1006 = vmul.f32 %v983, %v994
      %v1007 = vmul.f32 %v984, %v994
      %v1008 = vmul.f32 %v985, %v994
      %v1009 = vmul.f32 %v986, %v994
      %v1010 = vmul.f32 %v987, %v994
      %v1011 = vmul.f32 %v988, %v994
      %v1012 = vmul.f32 %v989, %v994
      %v1013 = vmul.f32 %v990, %v994
      %v1014 = vmul.f32 %v991, %v994
      %v1015 = vmul.f32 %v992, %v994
      %v1017 = vperm.slane %v532, 0
      %v1019 = vadd.f32 %v996, %v1017
      %v1020 = vadd.f32 %v997, %v1017
      %v1021 = vadd.f32 %v998, %v1017
      %v1022 = vadd.f32 %v999, %v1017
      %v1023 = vadd.f32 %v1000, %v1017
      %v1024 = vadd.f32 %v1001, %v1017
      %v1025 = vadd.f32 %v1002, %v1017
      %v1026 = vadd.f32 %v1003, %v1017
      %v1027 = vadd.f32 %v1004, %v1017
      %v1028 = vadd.f32 %v1005, %v1017
      %v1029 = vadd.f32 %v1006, %v1017
      %v1030 = vadd.f32 %v1007, %v1017
      %v1031 = vadd.f32 %v1008, %v1017
      %v1032 = vadd.f32 %v1009, %v1017
      %v1033 = vadd.f32 %v1010, %v1017
      %v1034 = vadd.f32 %v1011, %v1017
      %v1035 = vadd.f32 %v1012, %v1017
      %v1036 = vadd.f32 %v1013, %v1017
      %v1037 = vadd.f32 %v1014, %v1017
      %v1038 = vadd.f32 %v1015, %v1017
      %v1039 = vmax.f32 %v1019, 0.0
      %v1040 = vmax.f32 %v1020, 0.0
      %v1041 = vmax.f32 %v1021, 0.0
      %v1042 = vmax.f32 %v1022, 0.0
      %v1043 = vmax.f32 %v1023, 0.0
      %v1044 = vmax.f32 %v1024, 0.0
      %v1045 = vmax.f32 %v1025, 0.0
      %v1046 = vmax.f32 %v1026, 0.0
      %v1047 = vmax.f32 %v1027, 0.0
      %v1048 = vmax.f32 %v1028, 0.0
      %v1049 = vmax.f32 %v1029, 0.0
      %v1050 = vmax.f32 %v1030, 0.0
      %v1051 = vmax.f32 %v1031, 0.0
      %v1052 = vmax.f32 %v1032, 0.0
      %v1053 = vmax.f32 %v1033, 0.0
      %v1054 = vmax.f32 %v1034, 0.0
      %v1055 = vmax.f32 %v1035, 0.0
      %v1056 = vmax.f32 %v1036, 0.0
      %v1057 = vmax.f32 %v1037, 0.0
      %v1058 = vmax.f32 %v1038, 0.0
      %v1059 = vpack.c.bf16 %v1040, %v1039
      %v1060 = vpack.c.bf16 %v1042, %v1041
      %v1061 = vpack.c.bf16 %v1044, %v1043
      %v1062 = vpack.c.bf16 %v1046, %v1045
      %v1063 = vpack.c.bf16 %v1048, %v1047
      %v1064 = vpack.c.bf16 %v1050, %v1049
      %v1065 = vpack.c.bf16 %v1052, %v1051
      %v1066 = vpack.c.bf16 %v1054, %v1053
      %v1067 = vpack.c.bf16 %v1056, %v1055
      %v1068 = vpack.c.bf16 %v1058, %v1057
      %v1069 = vld [vmem:[%s5] sm:$0xf]
      %v1070 = vld [vmem:[%s5 + $0x4] sm:$0xf]
      %v1071 = vld [vmem:[%s5 + $0x8] sm:$0xf]
      %v1072 = vld [vmem:[%s5 + $0xc] sm:$0xf]
      %v1073 = vld [vmem:[%s5 + $0x10] sm:$0xf]
      %v1074 = vld [vmem:[%s5 + $0x14] sm:$0xf]
      %v1075 = vld [vmem:[%s5 + $0x18] sm:$0xf]
      %v1076 = vld [vmem:[%s5 + $0x1c] sm:$0xf]
      %v1077 = vld [vmem:[%s5 + $0x20] sm:$0xf]
      %v1078 = vld [vmem:[%s5 + $0x24] sm:$0xf]
      %v1079 = vld [vmem:[%s5 + $0x28] sm:$0xf]
      %v1080 = vld [vmem:[%s5 + $0x2c] sm:$0xf]
      %v1081 = vld [vmem:[%s5 + $0x30] sm:$0xf]
      %v1082 = vld [vmem:[%s5 + $0x34] sm:$0xf]
      %v1083 = vld [vmem:[%s5 + $0x38] sm:$0xf]
      %v1084 = vld [vmem:[%s5 + $0x3c] sm:$0xf]
      %v1085 = vld [vmem:[%s6] sm:$0x1]
      %v1087 = vperm.slane %v1085, 0
      %v1105 = vunpack.c.l.b16 %v1069
      %v1106 = vunpack.c.l.b16 %v1070
      %v1107 = vunpack.c.l.b16 %v1071
      %v1108 = vunpack.c.l.b16 %v1072
      %v1109 = vunpack.c.l.b16 %v1073
      %v1110 = vunpack.c.l.b16 %v1074
      %v1111 = vunpack.c.l.b16 %v1075
      %v1112 = vunpack.c.l.b16 %v1076
      %v1113 = vunpack.c.l.b16 %v1077
      %v1114 = vunpack.c.l.b16 %v1078
      %v1115 = vunpack.c.l.b16 %v1079
      %v1116 = vunpack.c.l.b16 %v1080
      %v1117 = vunpack.c.l.b16 %v1081
      %v1118 = vunpack.c.l.b16 %v1082
      %v1119 = vunpack.c.l.b16 %v1083
      %v1120 = vunpack.c.l.b16 %v1084
      %v1121 = vpack.c.b16 %v1106, %v1105
      %v1122 = vpack.c.b16 %v1108, %v1107
      %v1123 = vpack.c.b16 %v1110, %v1109
      %v1124 = vpack.c.b16 %v1112, %v1111
      %v1125 = vpack.c.b16 %v1114, %v1113
      %v1126 = vpack.c.b16 %v1116, %v1115
      %v1127 = vpack.c.b16 %v1118, %v1117
      %v1128 = vpack.c.b16 %v1120, %v1119
      %1137 = vmatpush.bf16.msra.mxu0 %v1128
      %1138 = vmatpush.bf16.msra.mxu0 %v1127
      %1139 = vmatpush.bf16.msra.mxu0 %v1126
      %1140 = vmatpush.bf16.msra.mxu0 %v1125
      %1141 = vmatpush.bf16.msra.mxu0 %v1124
      %1142 = vmatpush.bf16.msra.mxu0 %v1123
      %1143 = vmatpush.bf16.msra.mxu0 %v1122
      %1144 = vmatpush.bf16.msra.mxu0 %v1121
      %1145 = vmatmul.bf16.gmra.mxu0 %v1059
      %v1146 = vpop.f32.mrf.mxu0
      %v1147 = vadd.f32 %v1087, %v1146
      %v1148 = vpop.f32.mrf.mxu0
      %v1149 = vadd.f32 %v1087, %v1148
      %1150 = vmatmul.bf16.gmra.mxu0 %v1060
      %v1151 = vpop.f32.mrf.mxu0
      %v1152 = vadd.f32 %v1087, %v1151
      %v1153 = vpop.f32.mrf.mxu0
      %v1154 = vadd.f32 %v1087, %v1153
      %1155 = vmatmul.bf16.gmra.mxu0 %v1061
      %v1156 = vpop.f32.mrf.mxu0
      %v1157 = vadd.f32 %v1087, %v1156
      %v1158 = vpop.f32.mrf.mxu0
      %v1159 = vadd.f32 %v1087, %v1158
      %1160 = vmatmul.bf16.gmra.mxu0 %v1062
      %v1161 = vpop.f32.mrf.mxu0
      %v1162 = vadd.f32 %v1087, %v1161
      %v1163 = vpop.f32.mrf.mxu0
      %v1164 = vadd.f32 %v1087, %v1163
      %1165 = vmatmul.bf16.gmra.mxu0 %v1063
      %v1166 = vpop.f32.mrf.mxu0
      %v1167 = vadd.f32 %v1087, %v1166
      %v1168 = vpop.f32.mrf.mxu0
      %v1169 = vadd.f32 %v1087, %v1168
      %1170 = vmatmul.bf16.gmra.mxu0 %v1064
      %v1171 = vpop.f32.mrf.mxu0
      %v1172 = vadd.f32 %v1087, %v1171
      %v1173 = vpop.f32.mrf.mxu0
      %v1174 = vadd.f32 %v1087, %v1173
      %1175 = vmatmul.bf16.gmra.mxu0 %v1065
      %v1176 = vpop.f32.mrf.mxu0
      %v1177 = vadd.f32 %v1087, %v1176
      %v1178 = vpop.f32.mrf.mxu0
      %v1179 = vadd.f32 %v1087, %v1178
      %1180 = vmatmul.bf16.gmra.mxu0 %v1066
      %v1181 = vpop.f32.mrf.mxu0
      %v1182 = vadd.f32 %v1087, %v1181
      %v1183 = vpop.f32.mrf.mxu0
      %v1184 = vadd.f32 %v1087, %v1183
      %1185 = vmatmul.bf16.gmra.mxu0 %v1067
      %v1186 = vpop.f32.mrf.mxu0
      %v1187 = vadd.f32 %v1087, %v1186
      %v1188 = vpop.f32.mrf.mxu0
      %v1189 = vadd.f32 %v1087, %v1188
      %1190 = vmatmul.bf16.gmra.mxu0 %v1068
      %v1191 = vpop.f32.mrf.mxu0
      %v1192 = vadd.f32 %v1087, %v1191
      %v1193 = vpop.f32.mrf.mxu0
      %v1194 = vadd.f32 %v1087, %v1193
      %1195 = vdwg.mxu0
      %v1196 = vld [vmem:[%s7] sm:$0x1]
      %v1197 = vld [vmem:[%s8] sm:$0x1]
      %1198 = vadd.xlane.f32.xlu0 %v1147
      %v1199 = vpop.xlane.xlu0 %1198
      %1200 = vadd.xlane.f32.xlu0 %v1149
      %v1201 = vpop.xlane.xlu0 %1200
      %1202 = vadd.xlane.f32.xlu0 %v1152
      %v1203 = vpop.xlane.xlu0 %1202
      %1204 = vadd.xlane.f32.xlu0 %v1154
      %v1205 = vpop.xlane.xlu0 %1204
      %1206 = vadd.xlane.f32.xlu0 %v1157
      %v1207 = vpop.xlane.xlu0 %1206
      %1208 = vadd.xlane.f32.xlu0 %v1159
      %v1209 = vpop.xlane.xlu0 %1208
      %1210 = vadd.xlane.f32.xlu0 %v1162
      %v1211 = vpop.xlane.xlu0 %1210
      %1212 = vadd.xlane.f32.xlu0 %v1164
      %v1213 = vpop.xlane.xlu0 %1212
      %1214 = vadd.xlane.f32.xlu0 %v1167
      %v1215 = vpop.xlane.xlu0 %1214
      %1216 = vadd.xlane.f32.xlu0 %v1169
      %v1217 = vpop.xlane.xlu0 %1216
      %1218 = vadd.xlane.f32.xlu0 %v1172
      %v1219 = vpop.xlane.xlu0 %1218
      %1220 = vadd.xlane.f32.xlu0 %v1174
      %v1221 = vpop.xlane.xlu0 %1220
      %1222 = vadd.xlane.f32.xlu0 %v1177
      %v1223 = vpop.xlane.xlu0 %1222
      %1224 = vadd.xlane.f32.xlu0 %v1179
      %v1225 = vpop.xlane.xlu0 %1224
      %1226 = vadd.xlane.f32.xlu0 %v1182
      %v1227 = vpop.xlane.xlu0 %1226
      %1228 = vadd.xlane.f32.xlu0 %v1184
      %v1229 = vpop.xlane.xlu0 %1228
      %1230 = vadd.xlane.f32.xlu0 %v1187
      %v1231 = vpop.xlane.xlu0 %1230
      %1232 = vadd.xlane.f32.xlu0 %v1189
      %v1233 = vpop.xlane.xlu0 %1232
      %1234 = vadd.xlane.f32.xlu0 %v1192
      %v1235 = vpop.xlane.xlu0 %1234
      %1236 = vadd.xlane.f32.xlu0 %v1194
      %v1237 = vpop.xlane.xlu0 %1236
      %v1238 = vmul.f32 %v1199, 0.03125
      %v1239 = vmul.f32 %v1201, 0.03125
      %v1240 = vmul.f32 %v1203, 0.03125
      %v1241 = vmul.f32 %v1205, 0.03125
      %v1242 = vmul.f32 %v1207, 0.03125
      %v1243 = vmul.f32 %v1209, 0.03125
      %v1244 = vmul.f32 %v1211, 0.03125
      %v1245 = vmul.f32 %v1213, 0.03125
      %v1246 = vmul.f32 %v1215, 0.03125
      %v1247 = vmul.f32 %v1217, 0.03125
      %v1248 = vmul.f32 %v1219, 0.03125
      %v1249 = vmul.f32 %v1221, 0.03125
      %v1250 = vmul.f32 %v1223, 0.03125
      %v1251 = vmul.f32 %v1225, 0.03125
      %v1252 = vmul.f32 %v1227, 0.03125
      %v1253 = vmul.f32 %v1229, 0.03125
      %v1254 = vmul.f32 %v1231, 0.03125
      %v1255 = vmul.f32 %v1233, 0.03125
      %v1256 = vmul.f32 %v1235, 0.03125
      %v1257 = vmul.f32 %v1237, 0.03125
      %v1258 = vmul.f32 %v1147, %v1147
      %v1259 = vmul.f32 %v1149, %v1149
      %v1260 = vmul.f32 %v1152, %v1152
      %v1261 = vmul.f32 %v1154, %v1154
      %v1262 = vmul.f32 %v1157, %v1157
      %v1263 = vmul.f32 %v1159, %v1159
      %v1264 = vmul.f32 %v1162, %v1162
      %v1265 = vmul.f32 %v1164, %v1164
      %v1266 = vmul.f32 %v1167, %v1167
      %v1267 = vmul.f32 %v1169, %v1169
      %v1268 = vmul.f32 %v1172, %v1172
      %v1269 = vmul.f32 %v1174, %v1174
      %v1270 = vmul.f32 %v1177, %v1177
      %v1271 = vmul.f32 %v1179, %v1179
      %v1272 = vmul.f32 %v1182, %v1182
      %v1273 = vmul.f32 %v1184, %v1184
      %v1274 = vmul.f32 %v1187, %v1187
      %v1275 = vmul.f32 %v1189, %v1189
      %v1276 = vmul.f32 %v1192, %v1192
      %v1277 = vmul.f32 %v1194, %v1194
      %1278 = vadd.xlane.f32.xlu0 %v1258
      %v1279 = vpop.xlane.xlu0 %1278
      %1280 = vadd.xlane.f32.xlu0 %v1259
      %v1281 = vpop.xlane.xlu0 %1280
      %1282 = vadd.xlane.f32.xlu0 %v1260
      %v1283 = vpop.xlane.xlu0 %1282
      %1284 = vadd.xlane.f32.xlu0 %v1261
      %v1285 = vpop.xlane.xlu0 %1284
      %1286 = vadd.xlane.f32.xlu0 %v1262
      %v1287 = vpop.xlane.xlu0 %1286
      %1288 = vadd.xlane.f32.xlu0 %v1263
      %v1289 = vpop.xlane.xlu0 %1288
      %1290 = vadd.xlane.f32.xlu0 %v1264
      %v1291 = vpop.xlane.xlu0 %1290
      %1292 = vadd.xlane.f32.xlu0 %v1265
      %v1293 = vpop.xlane.xlu0 %1292
      %1294 = vadd.xlane.f32.xlu0 %v1266
      %v1295 = vpop.xlane.xlu0 %1294
      %1296 = vadd.xlane.f32.xlu0 %v1267
      %v1297 = vpop.xlane.xlu0 %1296
      %1298 = vadd.xlane.f32.xlu0 %v1268
      %v1299 = vpop.xlane.xlu0 %1298
      %1300 = vadd.xlane.f32.xlu0 %v1269
      %v1301 = vpop.xlane.xlu0 %1300
      %1302 = vadd.xlane.f32.xlu0 %v1270
      %v1303 = vpop.xlane.xlu0 %1302
      %1304 = vadd.xlane.f32.xlu0 %v1271
      %v1305 = vpop.xlane.xlu0 %1304
      %1306 = vadd.xlane.f32.xlu0 %v1272
      %v1307 = vpop.xlane.xlu0 %1306
      %1308 = vadd.xlane.f32.xlu0 %v1273
      %v1309 = vpop.xlane.xlu0 %1308
      %1310 = vadd.xlane.f32.xlu0 %v1274
      %v1311 = vpop.xlane.xlu0 %1310
      %1312 = vadd.xlane.f32.xlu0 %v1275
      %v1313 = vpop.xlane.xlu0 %1312
      %1314 = vadd.xlane.f32.xlu0 %v1276
      %v1315 = vpop.xlane.xlu0 %1314
      %1316 = vadd.xlane.f32.xlu0 %v1277
      %v1317 = vpop.xlane.xlu0 %1316
      %v1318 = vmul.f32 %v1279, 0.03125
      %v1319 = vmul.f32 %v1281, 0.03125
      %v1320 = vmul.f32 %v1283, 0.03125
      %v1321 = vmul.f32 %v1285, 0.03125
      %v1322 = vmul.f32 %v1287, 0.03125
      %v1323 = vmul.f32 %v1289, 0.03125
      %v1324 = vmul.f32 %v1291, 0.03125
      %v1325 = vmul.f32 %v1293, 0.03125
      %v1326 = vmul.f32 %v1295, 0.03125
      %v1327 = vmul.f32 %v1297, 0.03125
      %v1328 = vmul.f32 %v1299, 0.03125
      %v1329 = vmul.f32 %v1301, 0.03125
      %v1330 = vmul.f32 %v1303, 0.03125
      %v1331 = vmul.f32 %v1305, 0.03125
      %v1332 = vmul.f32 %v1307, 0.03125
      %v1333 = vmul.f32 %v1309, 0.03125
      %v1334 = vmul.f32 %v1311, 0.03125
      %v1335 = vmul.f32 %v1313, 0.03125
      %v1336 = vmul.f32 %v1315, 0.03125
      %v1337 = vmul.f32 %v1317, 0.03125
      %v1338 = vmul.f32 %v1238, %v1238
      %v1339 = vmul.f32 %v1239, %v1239
      %v1340 = vmul.f32 %v1240, %v1240
      %v1341 = vmul.f32 %v1241, %v1241
      %v1342 = vmul.f32 %v1242, %v1242
      %v1343 = vmul.f32 %v1243, %v1243
      %v1344 = vmul.f32 %v1244, %v1244
      %v1345 = vmul.f32 %v1245, %v1245
      %v1346 = vmul.f32 %v1246, %v1246
      %v1347 = vmul.f32 %v1247, %v1247
      %v1348 = vmul.f32 %v1248, %v1248
      %v1349 = vmul.f32 %v1249, %v1249
      %v1350 = vmul.f32 %v1250, %v1250
      %v1351 = vmul.f32 %v1251, %v1251
      %v1352 = vmul.f32 %v1252, %v1252
      %v1353 = vmul.f32 %v1253, %v1253
      %v1354 = vmul.f32 %v1254, %v1254
      %v1355 = vmul.f32 %v1255, %v1255
      %v1356 = vmul.f32 %v1256, %v1256
      %v1357 = vmul.f32 %v1257, %v1257
      %v1358 = vsub.f32 %v1318, %v1338
      %v1359 = vsub.f32 %v1319, %v1339
      %v1360 = vsub.f32 %v1320, %v1340
      %v1361 = vsub.f32 %v1321, %v1341
      %v1362 = vsub.f32 %v1322, %v1342
      %v1363 = vsub.f32 %v1323, %v1343
      %v1364 = vsub.f32 %v1324, %v1344
      %v1365 = vsub.f32 %v1325, %v1345
      %v1366 = vsub.f32 %v1326, %v1346
      %v1367 = vsub.f32 %v1327, %v1347
      %v1368 = vsub.f32 %v1328, %v1348
      %v1369 = vsub.f32 %v1329, %v1349
      %v1370 = vsub.f32 %v1330, %v1350
      %v1371 = vsub.f32 %v1331, %v1351
      %v1372 = vsub.f32 %v1332, %v1352
      %v1373 = vsub.f32 %v1333, %v1353
      %v1374 = vsub.f32 %v1334, %v1354
      %v1375 = vsub.f32 %v1335, %v1355
      %v1376 = vsub.f32 %v1336, %v1356
      %v1377 = vsub.f32 %v1337, %v1357
      %v1378 = vmax.f32 %v1358, 0.0
      %v1379 = vmax.f32 %v1359, 0.0
      %v1380 = vmax.f32 %v1360, 0.0
      %v1381 = vmax.f32 %v1361, 0.0
      %v1382 = vmax.f32 %v1362, 0.0
      %v1383 = vmax.f32 %v1363, 0.0
      %v1384 = vmax.f32 %v1364, 0.0
      %v1385 = vmax.f32 %v1365, 0.0
      %v1386 = vmax.f32 %v1366, 0.0
      %v1387 = vmax.f32 %v1367, 0.0
      %v1388 = vmax.f32 %v1368, 0.0
      %v1389 = vmax.f32 %v1369, 0.0
      %v1390 = vmax.f32 %v1370, 0.0
      %v1391 = vmax.f32 %v1371, 0.0
      %v1392 = vmax.f32 %v1372, 0.0
      %v1393 = vmax.f32 %v1373, 0.0
      %v1394 = vmax.f32 %v1374, 0.0
      %v1395 = vmax.f32 %v1375, 0.0
      %v1396 = vmax.f32 %v1376, 0.0
      %v1397 = vmax.f32 %v1377, 0.0
      %v1398 = vsub.f32 %v1147, %v1238
      %v1399 = vsub.f32 %v1149, %v1239
      %v1400 = vsub.f32 %v1152, %v1240
      %v1401 = vsub.f32 %v1154, %v1241
      %v1402 = vsub.f32 %v1157, %v1242
      %v1403 = vsub.f32 %v1159, %v1243
      %v1404 = vsub.f32 %v1162, %v1244
      %v1405 = vsub.f32 %v1164, %v1245
      %v1406 = vsub.f32 %v1167, %v1246
      %v1407 = vsub.f32 %v1169, %v1247
      %v1408 = vsub.f32 %v1172, %v1248
      %v1409 = vsub.f32 %v1174, %v1249
      %v1410 = vsub.f32 %v1177, %v1250
      %v1411 = vsub.f32 %v1179, %v1251
      %v1412 = vsub.f32 %v1182, %v1252
      %v1413 = vsub.f32 %v1184, %v1253
      %v1414 = vsub.f32 %v1187, %v1254
      %v1415 = vsub.f32 %v1189, %v1255
      %v1416 = vsub.f32 %v1192, %v1256
      %v1417 = vsub.f32 %v1194, %v1257
      %v1418 = vadd.f32 %v1378, 1e-05
      %v1419 = vadd.f32 %v1379, 1e-05
      %v1420 = vadd.f32 %v1380, 1e-05
      %v1421 = vadd.f32 %v1381, 1e-05
      %v1422 = vadd.f32 %v1382, 1e-05
      %v1423 = vadd.f32 %v1383, 1e-05
      %v1424 = vadd.f32 %v1384, 1e-05
      %v1425 = vadd.f32 %v1385, 1e-05
      %v1426 = vadd.f32 %v1386, 1e-05
      %v1427 = vadd.f32 %v1387, 1e-05
      %v1428 = vadd.f32 %v1388, 1e-05
      %v1429 = vadd.f32 %v1389, 1e-05
      %v1430 = vadd.f32 %v1390, 1e-05
      %v1431 = vadd.f32 %v1391, 1e-05
      %v1432 = vadd.f32 %v1392, 1e-05
      %v1433 = vadd.f32 %v1393, 1e-05
      %v1434 = vadd.f32 %v1394, 1e-05
      %v1435 = vadd.f32 %v1395, 1e-05
      %v1436 = vadd.f32 %v1396, 1e-05
      %v1437 = vadd.f32 %v1397, 1e-05
      %v1438 = vrsqrt.pop %v1418
      %v1439 = vmul.f32 %v1438, %v1418
      %v1440 = vmul.f32 %v1439, %v1438
      %v1441 = vmul.f32 0.5, %v1440
      %v1442 = vsub.f32 1.5, %v1441
      %v1443 = vmul.f32 %v1438, %v1442
      %vm1444 = vweird.f32 %v1418
      %vm1445 = vweird.f32 %v1438
      %vm1446 = vmor %vm1444, %vm1445
      %v1447 = vsel %vm1446, %v1438, %v1443
      %v1448 = vrsqrt.pop %v1419
      %v1449 = vmul.f32 %v1448, %v1419
      %v1450 = vmul.f32 %v1449, %v1448
      %v1451 = vmul.f32 0.5, %v1450
      %v1452 = vsub.f32 1.5, %v1451
      %v1453 = vmul.f32 %v1448, %v1452
      %vm1454 = vweird.f32 %v1419
      %vm1455 = vweird.f32 %v1448
      %vm1456 = vmor %vm1454, %vm1455
      %v1457 = vsel %vm1456, %v1448, %v1453
      %v1458 = vrsqrt.pop %v1420
      %v1459 = vmul.f32 %v1458, %v1420
      %v1460 = vmul.f32 %v1459, %v1458
      %v1461 = vmul.f32 0.5, %v1460
      %v1462 = vsub.f32 1.5, %v1461
      %v1463 = vmul.f32 %v1458, %v1462
      %vm1464 = vweird.f32 %v1420
      %vm1465 = vweird.f32 %v1458
      %vm1466 = vmor %vm1464, %vm1465
      %v1467 = vsel %vm1466, %v1458, %v1463
      %v1468 = vrsqrt.pop %v1421
      %v1469 = vmul.f32 %v1468, %v1421
      %v1470 = vmul.f32 %v1469, %v1468
      %v1471 = vmul.f32 0.5, %v1470
      %v1472 = vsub.f32 1.5, %v1471
      %v1473 = vmul.f32 %v1468, %v1472
      %vm1474 = vweird.f32 %v1421
      %vm1475 = vweird.f32 %v1468
      %vm1476 = vmor %vm1474, %vm1475
      %v1477 = vsel %vm1476, %v1468, %v1473
      %v1478 = vrsqrt.pop %v1422
      %v1479 = vmul.f32 %v1478, %v1422
      %v1480 = vmul.f32 %v1479, %v1478
      %v1481 = vmul.f32 0.5, %v1480
      %v1482 = vsub.f32 1.5, %v1481
      %v1483 = vmul.f32 %v1478, %v1482
      %vm1484 = vweird.f32 %v1422
      %vm1485 = vweird.f32 %v1478
      %vm1486 = vmor %vm1484, %vm1485
      %v1487 = vsel %vm1486, %v1478, %v1483
      %v1488 = vrsqrt.pop %v1423
      %v1489 = vmul.f32 %v1488, %v1423
      %v1490 = vmul.f32 %v1489, %v1488
      %v1491 = vmul.f32 0.5, %v1490
      %v1492 = vsub.f32 1.5, %v1491
      %v1493 = vmul.f32 %v1488, %v1492
      %vm1494 = vweird.f32 %v1423
      %vm1495 = vweird.f32 %v1488
      %vm1496 = vmor %vm1494, %vm1495
      %v1497 = vsel %vm1496, %v1488, %v1493
      %v1498 = vrsqrt.pop %v1424
      %v1499 = vmul.f32 %v1498, %v1424
      %v1500 = vmul.f32 %v1499, %v1498
      %v1501 = vmul.f32 0.5, %v1500
      %v1502 = vsub.f32 1.5, %v1501
      %v1503 = vmul.f32 %v1498, %v1502
      %vm1504 = vweird.f32 %v1424
      %vm1505 = vweird.f32 %v1498
      %vm1506 = vmor %vm1504, %vm1505
      %v1507 = vsel %vm1506, %v1498, %v1503
      %v1508 = vrsqrt.pop %v1425
      %v1509 = vmul.f32 %v1508, %v1425
      %v1510 = vmul.f32 %v1509, %v1508
      %v1511 = vmul.f32 0.5, %v1510
      %v1512 = vsub.f32 1.5, %v1511
      %v1513 = vmul.f32 %v1508, %v1512
      %vm1514 = vweird.f32 %v1425
      %vm1515 = vweird.f32 %v1508
      %vm1516 = vmor %vm1514, %vm1515
      %v1517 = vsel %vm1516, %v1508, %v1513
      %v1518 = vrsqrt.pop %v1426
      %v1519 = vmul.f32 %v1518, %v1426
      %v1520 = vmul.f32 %v1519, %v1518
      %v1521 = vmul.f32 0.5, %v1520
      %v1522 = vsub.f32 1.5, %v1521
      %v1523 = vmul.f32 %v1518, %v1522
      %vm1524 = vweird.f32 %v1426
      %vm1525 = vweird.f32 %v1518
      %vm1526 = vmor %vm1524, %vm1525
      %v1527 = vsel %vm1526, %v1518, %v1523
      %v1528 = vrsqrt.pop %v1427
      %v1529 = vmul.f32 %v1528, %v1427
      %v1530 = vmul.f32 %v1529, %v1528
      %v1531 = vmul.f32 0.5, %v1530
      %v1532 = vsub.f32 1.5, %v1531
      %v1533 = vmul.f32 %v1528, %v1532
      %vm1534 = vweird.f32 %v1427
      %vm1535 = vweird.f32 %v1528
      %vm1536 = vmor %vm1534, %vm1535
      %v1537 = vsel %vm1536, %v1528, %v1533
      %v1538 = vrsqrt.pop %v1428
      %v1539 = vmul.f32 %v1538, %v1428
      %v1540 = vmul.f32 %v1539, %v1538
      %v1541 = vmul.f32 0.5, %v1540
      %v1542 = vsub.f32 1.5, %v1541
      %v1543 = vmul.f32 %v1538, %v1542
      %vm1544 = vweird.f32 %v1428
      %vm1545 = vweird.f32 %v1538
      %vm1546 = vmor %vm1544, %vm1545
      %v1547 = vsel %vm1546, %v1538, %v1543
      %v1548 = vrsqrt.pop %v1429
      %v1549 = vmul.f32 %v1548, %v1429
      %v1550 = vmul.f32 %v1549, %v1548
      %v1551 = vmul.f32 0.5, %v1550
      %v1552 = vsub.f32 1.5, %v1551
      %v1553 = vmul.f32 %v1548, %v1552
      %vm1554 = vweird.f32 %v1429
      %vm1555 = vweird.f32 %v1548
      %vm1556 = vmor %vm1554, %vm1555
      %v1557 = vsel %vm1556, %v1548, %v1553
      %v1558 = vrsqrt.pop %v1430
      %v1559 = vmul.f32 %v1558, %v1430
      %v1560 = vmul.f32 %v1559, %v1558
      %v1561 = vmul.f32 0.5, %v1560
      %v1562 = vsub.f32 1.5, %v1561
      %v1563 = vmul.f32 %v1558, %v1562
      %vm1564 = vweird.f32 %v1430
      %vm1565 = vweird.f32 %v1558
      %vm1566 = vmor %vm1564, %vm1565
      %v1567 = vsel %vm1566, %v1558, %v1563
      %v1568 = vrsqrt.pop %v1431
      %v1569 = vmul.f32 %v1568, %v1431
      %v1570 = vmul.f32 %v1569, %v1568
      %v1571 = vmul.f32 0.5, %v1570
      %v1572 = vsub.f32 1.5, %v1571
      %v1573 = vmul.f32 %v1568, %v1572
      %vm1574 = vweird.f32 %v1431
      %vm1575 = vweird.f32 %v1568
      %vm1576 = vmor %vm1574, %vm1575
      %v1577 = vsel %vm1576, %v1568, %v1573
      %v1578 = vrsqrt.pop %v1432
      %v1579 = vmul.f32 %v1578, %v1432
      %v1580 = vmul.f32 %v1579, %v1578
      %v1581 = vmul.f32 0.5, %v1580
      %v1582 = vsub.f32 1.5, %v1581
      %v1583 = vmul.f32 %v1578, %v1582
      %vm1584 = vweird.f32 %v1432
      %vm1585 = vweird.f32 %v1578
      %vm1586 = vmor %vm1584, %vm1585
      %v1587 = vsel %vm1586, %v1578, %v1583
      %v1588 = vrsqrt.pop %v1433
      %v1589 = vmul.f32 %v1588, %v1433
      %v1590 = vmul.f32 %v1589, %v1588
      %v1591 = vmul.f32 0.5, %v1590
      %v1592 = vsub.f32 1.5, %v1591
      %v1593 = vmul.f32 %v1588, %v1592
      %vm1594 = vweird.f32 %v1433
      %vm1595 = vweird.f32 %v1588
      %vm1596 = vmor %vm1594, %vm1595
      %v1597 = vsel %vm1596, %v1588, %v1593
      %v1598 = vrsqrt.pop %v1434
      %v1599 = vmul.f32 %v1598, %v1434
      %v1600 = vmul.f32 %v1599, %v1598
      %v1601 = vmul.f32 0.5, %v1600
      %v1602 = vsub.f32 1.5, %v1601
      %v1603 = vmul.f32 %v1598, %v1602
      %vm1604 = vweird.f32 %v1434
      %vm1605 = vweird.f32 %v1598
      %vm1606 = vmor %vm1604, %vm1605
      %v1607 = vsel %vm1606, %v1598, %v1603
      %v1608 = vrsqrt.pop %v1435
      %v1609 = vmul.f32 %v1608, %v1435
      %v1610 = vmul.f32 %v1609, %v1608
      %v1611 = vmul.f32 0.5, %v1610
      %v1612 = vsub.f32 1.5, %v1611
      %v1613 = vmul.f32 %v1608, %v1612
      %vm1614 = vweird.f32 %v1435
      %vm1615 = vweird.f32 %v1608
      %vm1616 = vmor %vm1614, %vm1615
      %v1617 = vsel %vm1616, %v1608, %v1613
      %v1618 = vrsqrt.pop %v1436
      %v1619 = vmul.f32 %v1618, %v1436
      %v1620 = vmul.f32 %v1619, %v1618
      %v1621 = vmul.f32 0.5, %v1620
      %v1622 = vsub.f32 1.5, %v1621
      %v1623 = vmul.f32 %v1618, %v1622
      %vm1624 = vweird.f32 %v1436
      %vm1625 = vweird.f32 %v1618
      %vm1626 = vmor %vm1624, %vm1625
      %v1627 = vsel %vm1626, %v1618, %v1623
      %v1628 = vrsqrt.pop %v1437
      %v1629 = vmul.f32 %v1628, %v1437
      %v1630 = vmul.f32 %v1629, %v1628
      %v1631 = vmul.f32 0.5, %v1630
      %v1632 = vsub.f32 1.5, %v1631
      %v1633 = vmul.f32 %v1628, %v1632
      %vm1634 = vweird.f32 %v1437
      %vm1635 = vweird.f32 %v1628
      %vm1636 = vmor %vm1634, %vm1635
      %v1637 = vsel %vm1636, %v1628, %v1633
      %v1638 = vmul.f32 %v1398, %v1447
      %v1639 = vmul.f32 %v1399, %v1457
      %v1640 = vmul.f32 %v1400, %v1467
      %v1641 = vmul.f32 %v1401, %v1477
      %v1642 = vmul.f32 %v1402, %v1487
      %v1643 = vmul.f32 %v1403, %v1497
      %v1644 = vmul.f32 %v1404, %v1507
      %v1645 = vmul.f32 %v1405, %v1517
      %v1646 = vmul.f32 %v1406, %v1527
      %v1647 = vmul.f32 %v1407, %v1537
      %v1648 = vmul.f32 %v1408, %v1547
      %v1649 = vmul.f32 %v1409, %v1557
      %v1650 = vmul.f32 %v1410, %v1567
      %v1651 = vmul.f32 %v1411, %v1577
      %v1652 = vmul.f32 %v1412, %v1587
      %v1653 = vmul.f32 %v1413, %v1597
      %v1654 = vmul.f32 %v1414, %v1607
      %v1655 = vmul.f32 %v1415, %v1617
      %v1656 = vmul.f32 %v1416, %v1627
      %v1657 = vmul.f32 %v1417, %v1637
      %v1659 = vperm.slane %v1196, 0
      %v1661 = vmul.f32 %v1638, %v1659
      %v1662 = vmul.f32 %v1639, %v1659
      %v1663 = vmul.f32 %v1640, %v1659
      %v1664 = vmul.f32 %v1641, %v1659
      %v1665 = vmul.f32 %v1642, %v1659
      %v1666 = vmul.f32 %v1643, %v1659
      %v1667 = vmul.f32 %v1644, %v1659
      %v1668 = vmul.f32 %v1645, %v1659
      %v1669 = vmul.f32 %v1646, %v1659
      %v1670 = vmul.f32 %v1647, %v1659
      %v1671 = vmul.f32 %v1648, %v1659
      %v1672 = vmul.f32 %v1649, %v1659
      %v1673 = vmul.f32 %v1650, %v1659
      %v1674 = vmul.f32 %v1651, %v1659
      %v1675 = vmul.f32 %v1652, %v1659
      %v1676 = vmul.f32 %v1653, %v1659
      %v1677 = vmul.f32 %v1654, %v1659
      %v1678 = vmul.f32 %v1655, %v1659
      %v1679 = vmul.f32 %v1656, %v1659
      %v1680 = vmul.f32 %v1657, %v1659
      %v1682 = vperm.slane %v1197, 0
      %v1684 = vadd.f32 %v1661, %v1682
      %v1685 = vadd.f32 %v1662, %v1682
      %v1686 = vadd.f32 %v1663, %v1682
      %v1687 = vadd.f32 %v1664, %v1682
      %v1688 = vadd.f32 %v1665, %v1682
      %v1689 = vadd.f32 %v1666, %v1682
      %v1690 = vadd.f32 %v1667, %v1682
      %v1691 = vadd.f32 %v1668, %v1682
      %v1692 = vadd.f32 %v1669, %v1682
      %v1693 = vadd.f32 %v1670, %v1682
      %v1694 = vadd.f32 %v1671, %v1682
      %v1695 = vadd.f32 %v1672, %v1682
      %v1696 = vadd.f32 %v1673, %v1682
      %v1697 = vadd.f32 %v1674, %v1682
      %v1698 = vadd.f32 %v1675, %v1682
      %v1699 = vadd.f32 %v1676, %v1682
      %v1700 = vadd.f32 %v1677, %v1682
      %v1701 = vadd.f32 %v1678, %v1682
      %v1702 = vadd.f32 %v1679, %v1682
      %v1703 = vadd.f32 %v1680, %v1682
      %v1704 = vmax.f32 %v1684, 0.0
      %v1705 = vmax.f32 %v1685, 0.0
      %v1706 = vmax.f32 %v1686, 0.0
      %v1707 = vmax.f32 %v1687, 0.0
      %v1708 = vmax.f32 %v1688, 0.0
      %v1709 = vmax.f32 %v1689, 0.0
      %v1710 = vmax.f32 %v1690, 0.0
      %v1711 = vmax.f32 %v1691, 0.0
      %v1712 = vmax.f32 %v1692, 0.0
      %v1713 = vmax.f32 %v1693, 0.0
      %v1714 = vmax.f32 %v1694, 0.0
      %v1715 = vmax.f32 %v1695, 0.0
      %v1716 = vmax.f32 %v1696, 0.0
      %v1717 = vmax.f32 %v1697, 0.0
      %v1718 = vmax.f32 %v1698, 0.0
      %v1719 = vmax.f32 %v1699, 0.0
      %v1720 = vmax.f32 %v1700, 0.0
      %v1721 = vmax.f32 %v1701, 0.0
      %v1722 = vmax.f32 %v1702, 0.0
      %v1723 = vmax.f32 %v1703, 0.0
      %v1724 = vpack.c.bf16 %v1705, %v1704
      %v1725 = vpack.c.bf16 %v1707, %v1706
      %v1726 = vpack.c.bf16 %v1709, %v1708
      %v1727 = vpack.c.bf16 %v1711, %v1710
      %v1728 = vpack.c.bf16 %v1713, %v1712
      %v1729 = vpack.c.bf16 %v1715, %v1714
      %v1730 = vpack.c.bf16 %v1717, %v1716
      %v1731 = vpack.c.bf16 %v1719, %v1718
      %v1732 = vpack.c.bf16 %v1721, %v1720
      %v1733 = vpack.c.bf16 %v1723, %v1722
      %v1734 = vld [vmem:[%s9] sm:$0xf]
      %v1735 = vld [vmem:[%s9 + $0x4] sm:$0xf]
      %v1736 = vld [vmem:[%s9 + $0x8] sm:$0xf]
      %v1737 = vld [vmem:[%s9 + $0xc] sm:$0xf]
      %v1738 = vld [vmem:[%s9 + $0x10] sm:$0xf]
      %v1739 = vld [vmem:[%s9 + $0x14] sm:$0xf]
      %v1740 = vld [vmem:[%s9 + $0x18] sm:$0xf]
      %v1741 = vld [vmem:[%s9 + $0x1c] sm:$0xf]
      %v1742 = vld [vmem:[%s9 + $0x20] sm:$0xf]
      %v1743 = vld [vmem:[%s9 + $0x24] sm:$0xf]
      %v1744 = vld [vmem:[%s9 + $0x28] sm:$0xf]
      %v1745 = vld [vmem:[%s9 + $0x2c] sm:$0xf]
      %v1746 = vld [vmem:[%s9 + $0x30] sm:$0xf]
      %v1747 = vld [vmem:[%s9 + $0x34] sm:$0xf]
      %v1748 = vld [vmem:[%s9 + $0x38] sm:$0xf]
      %v1749 = vld [vmem:[%s9 + $0x3c] sm:$0xf]
      %v1750 = vld [vmem:[%s10] sm:$0x1]
      %v1752 = vperm.slane %v1750, 0
      %v1770 = vunpack.c.l.b16 %v1734
      %v1771 = vunpack.c.l.b16 %v1735
      %v1772 = vunpack.c.l.b16 %v1736
      %v1773 = vunpack.c.l.b16 %v1737
      %v1774 = vunpack.c.l.b16 %v1738
      %v1775 = vunpack.c.l.b16 %v1739
      %v1776 = vunpack.c.l.b16 %v1740
      %v1777 = vunpack.c.l.b16 %v1741
      %v1778 = vunpack.c.l.b16 %v1742
      %v1779 = vunpack.c.l.b16 %v1743
      %v1780 = vunpack.c.l.b16 %v1744
      %v1781 = vunpack.c.l.b16 %v1745
      %v1782 = vunpack.c.l.b16 %v1746
      %v1783 = vunpack.c.l.b16 %v1747
      %v1784 = vunpack.c.l.b16 %v1748
      %v1785 = vunpack.c.l.b16 %v1749
      %v1786 = vpack.c.b16 %v1771, %v1770
      %v1787 = vpack.c.b16 %v1773, %v1772
      %v1788 = vpack.c.b16 %v1775, %v1774
      %v1789 = vpack.c.b16 %v1777, %v1776
      %v1790 = vpack.c.b16 %v1779, %v1778
      %v1791 = vpack.c.b16 %v1781, %v1780
      %v1792 = vpack.c.b16 %v1783, %v1782
      %v1793 = vpack.c.b16 %v1785, %v1784
      %1802 = vmatpush.bf16.msra.mxu0 %v1793
      %1803 = vmatpush.bf16.msra.mxu0 %v1792
      %1804 = vmatpush.bf16.msra.mxu0 %v1791
      %1805 = vmatpush.bf16.msra.mxu0 %v1790
      %1806 = vmatpush.bf16.msra.mxu0 %v1789
      %1807 = vmatpush.bf16.msra.mxu0 %v1788
      %1808 = vmatpush.bf16.msra.mxu0 %v1787
      %1809 = vmatpush.bf16.msra.mxu0 %v1786
      %1810 = vmatmul.bf16.gmra.mxu0 %v1724
      %v1811 = vpop.f32.mrf.mxu0
      %v1812 = vadd.f32 %v1752, %v1811
      %v1813 = vpop.f32.mrf.mxu0
      %v1814 = vadd.f32 %v1752, %v1813
      %1815 = vmatmul.bf16.gmra.mxu0 %v1725
      %v1816 = vpop.f32.mrf.mxu0
      %v1817 = vadd.f32 %v1752, %v1816
      %v1818 = vpop.f32.mrf.mxu0
      %v1819 = vadd.f32 %v1752, %v1818
      %1820 = vmatmul.bf16.gmra.mxu0 %v1726
      %v1821 = vpop.f32.mrf.mxu0
      %v1822 = vadd.f32 %v1752, %v1821
      %v1823 = vpop.f32.mrf.mxu0
      %v1824 = vadd.f32 %v1752, %v1823
      %1825 = vmatmul.bf16.gmra.mxu0 %v1727
      %v1826 = vpop.f32.mrf.mxu0
      %v1827 = vadd.f32 %v1752, %v1826
      %v1828 = vpop.f32.mrf.mxu0
      %v1829 = vadd.f32 %v1752, %v1828
      %1830 = vmatmul.bf16.gmra.mxu0 %v1728
      %v1831 = vpop.f32.mrf.mxu0
      %v1832 = vadd.f32 %v1752, %v1831
      %v1833 = vpop.f32.mrf.mxu0
      %v1834 = vadd.f32 %v1752, %v1833
      %1835 = vmatmul.bf16.gmra.mxu0 %v1729
      %v1836 = vpop.f32.mrf.mxu0
      %v1837 = vadd.f32 %v1752, %v1836
      %v1838 = vpop.f32.mrf.mxu0
      %v1839 = vadd.f32 %v1752, %v1838
      %1840 = vmatmul.bf16.gmra.mxu0 %v1730
      %v1841 = vpop.f32.mrf.mxu0
      %v1842 = vadd.f32 %v1752, %v1841
      %v1843 = vpop.f32.mrf.mxu0
      %v1844 = vadd.f32 %v1752, %v1843
      %1845 = vmatmul.bf16.gmra.mxu0 %v1731
      %v1846 = vpop.f32.mrf.mxu0
      %v1847 = vadd.f32 %v1752, %v1846
      %v1848 = vpop.f32.mrf.mxu0
      %v1849 = vadd.f32 %v1752, %v1848
      %1850 = vmatmul.bf16.gmra.mxu0 %v1732
      %v1851 = vpop.f32.mrf.mxu0
      %v1852 = vadd.f32 %v1752, %v1851
      %v1853 = vpop.f32.mrf.mxu0
      %v1854 = vadd.f32 %v1752, %v1853
      %1855 = vmatmul.bf16.gmra.mxu0 %v1733
      %v1856 = vpop.f32.mrf.mxu0
      %v1857 = vadd.f32 %v1752, %v1856
      %v1858 = vpop.f32.mrf.mxu0
      %v1859 = vadd.f32 %v1752, %v1858
      %1860 = vdwg.mxu0
      %vm1861 = vcmask 64512
      %1862 = vst.msk [vmem:[%s388] sm:$0xff] %vm1861, %v1812
      %1863 = vst.msk [vmem:[%s388 + $0x8] sm:$0xff] %vm1861, %v1814
      %1864 = vst.msk [vmem:[%s388 + $0x10] sm:$0xff] %vm1861, %v1817
      %1865 = vst.msk [vmem:[%s388 + $0x18] sm:$0xff] %vm1861, %v1819
      %1866 = vst.msk [vmem:[%s388 + $0x20] sm:$0xff] %vm1861, %v1822
      %1867 = vst.msk [vmem:[%s388 + $0x28] sm:$0xff] %vm1861, %v1824
      %1868 = vst.msk [vmem:[%s388 + $0x30] sm:$0xff] %vm1861, %v1827
      %1869 = vst.msk [vmem:[%s388 + $0x38] sm:$0xff] %vm1861, %v1829
      %1870 = vst.msk [vmem:[%s388 + $0x40] sm:$0xff] %vm1861, %v1832
      %1871 = vst.msk [vmem:[%s388 + $0x48] sm:$0xff] %vm1861, %v1834
      %1872 = vst.msk [vmem:[%s388 + $0x50] sm:$0xff] %vm1861, %v1837
      %1873 = vst.msk [vmem:[%s388 + $0x58] sm:$0xff] %vm1861, %v1839
      %1874 = vst.msk [vmem:[%s388 + $0x60] sm:$0xff] %vm1861, %v1842
      %1875 = vst.msk [vmem:[%s388 + $0x68] sm:$0xff] %vm1861, %v1844
      %1876 = vst.msk [vmem:[%s388 + $0x70] sm:$0xff] %vm1861, %v1847
      %1877 = vst.msk [vmem:[%s388 + $0x78] sm:$0xff] %vm1861, %v1849
      %1878 = vst.msk [vmem:[%s388 + $0x80] sm:$0xff] %vm1861, %v1852
      %1879 = vst.msk [vmem:[%s388 + $0x88] sm:$0xff] %vm1861, %v1854
      %1880 = vst.msk [vmem:[%s388 + $0x90] sm:$0xff] %vm1861, %v1857
      %1881 = vst.msk [vmem:[%s388 + $0x98] sm:$0xff] %vm1861, %v1859
      %s1882 = smul.u32 20, %s22
      %p1883 = scmp.lt.s32.totalorder %s1882, 39
      %s1884 = scalar_select %p1883, %s1882, 39
      %s1885 = smul.addr %s1884, 8
      %s1886 = scalar_lea.vmem %s11, %s1885
      // Predicated region
      $region65: #{_lambda_.1} parent=63 // pred_check
        %p1887 = pneg %p276
      $region66: #{_lambda_.1} parent=63 // pred_check_branch
        %1889 = sbr.rel (%p1887) target = $region68
      $region67: #{_lambda_.1} parent=63 // pred_region
        %s1890 = smul.u32 20, %s22
      $region68: #{_lambda_.1} parent=63 // pred_fallthru
        _
    $region64: #{_lambda_.1} parent=5 // pred_fallthru
      _
    %p1891 = scmp.le.s32.totalorder 2, %s17
    // Predicated region
    $region69: #{_lambda_.1} parent=5 // pred_check
      %p1892 = pneg %p1891
    $region70: #{_lambda_.1} parent=5 // pred_check_branch
      %1894 = sbr.rel (%p1892) target = $region72
    $region71: #{_lambda_.1} parent=5 // pred_region
      %s1895 = ssub.s32 %s17, 2
      // Predicated region
      $region73: #{_lambda_.1} parent=71 // pred_check
        %p1896 = pneg %p282
      $region74: #{_lambda_.1} parent=71 // pred_check_branch
        %1898 = sbr.rel (%p1896) target = $region76
      $region75: #{_lambda_.1} parent=71 // pred_region
        %s1899 = smul.u32 20, %s23
        %p1900 = scmp.lt.s32.totalorder %s1899, 39
        %s1901 = scalar_select %p1900, %s1899, 39
        %s1902 = smul.addr %s1901, 8
        %s1903 = scalar_lea.vmem %s11, %s1902
      $region76: #{_lambda_.1} parent=71 // pred_fallthru
        _
    $region72: #{_lambda_.1} parent=5 // pred_fallthru
      _
  $region6: #{_lambda_.1} parent=0 // loop_footer
    %s21 = sadd.s32 1, %s17
  $region7: #{_lambda_.1} parent=0 // loop_footer_branch
    %16 = sbr.rel target = $region3
  $region8: #{_lambda_.1} parent=0 // loop_exit
    _

</llo_original>
